<compile_context>
chip_gen: v5e
topology: v5e:2x2
jax: 0.10.0
libtpu: 0.0.40
codegen_flags: <defaults>
</compile_context>

<pallas_src>
import functools

import jax
import jax.numpy as jnp
from jax.experimental import pallas as pl
from jax.experimental.pallas import tpu as pltpu

_LANE = 128        # TPU lane width; Cout is padded to this for lane-dense stores
_MAX_SINGLE_TILE = 512


def _round_up(x, m):
    return ((x + m - 1) // m) * m


# -----------------------------------------------------------------------------
# Pallas kernels: fused (patches @ weight) + bias (+ residual add) (+ ReLU)
#   - inputs a/w are bf16 (MXU native rate), accumulation f32
#   - epilogue (bias / add / relu) entirely in f32
# -----------------------------------------------------------------------------
def _mm_kernel(a_ref, w_ref, b_ref, o_ref, *, apply_relu):
    acc = jnp.dot(a_ref[...], w_ref[...], preferred_element_type=jnp.float32)
    acc = acc + b_ref[...]
    if apply_relu:
        acc = jnp.maximum(acc, 0.0)
    o_ref[...] = acc.astype(o_ref.dtype)


def _mm_add_kernel(a_ref, w_ref, b_ref, add_ref, o_ref, *, apply_relu):
    acc = jnp.dot(a_ref[...], w_ref[...], preferred_element_type=jnp.float32)
    acc = acc + b_ref[...] + add_ref[...]
    if apply_relu:
        acc = jnp.maximum(acc, 0.0)
    o_ref[...] = acc.astype(o_ref.dtype)


def _fused_matmul(a, w, b, add=None, apply_relu=False):
    """a: (M, K) f32, w: (K, Npad) f32, b: (Npad,) f32, add: (M, Npad) f32 or None.

    Npad must be a multiple of 128 (lane-dense output). Returns (M, Npad) f32.
    """
    M, K = a.shape
    Kw, N = w.shape
    assert Kw == K and N % _LANE == 0

    # Tile policy: one tile (rounded up to a sublane multiple) for small M,
    # otherwise 256-row tiles; M is zero-padded, never asserted.
    if M <= _MAX_SINGLE_TILE:
        tm = _round_up(max(M, 8), 8)
        m_pad = tm
    else:
        tm = 256
        m_pad = _round_up(M, tm)

    if m_pad != M:
        a = jnp.pad(a, ((0, m_pad - M), (0, 0)))
        if add is not None:
            add = jnp.pad(add, ((0, m_pad - M), (0, 0)))

    a_bf = a.astype(jnp.bfloat16)
    w_bf = w.astype(jnp.bfloat16)
    b2 = b.reshape(1, N).astype(jnp.float32)

    grid = (m_pad // tm,)
    a_spec = pl.BlockSpec((tm, K), lambda i: (i, 0))      # activation tile
    w_spec = pl.BlockSpec((K, N), lambda i: (0, 0))       # weight (resident)
    b_spec = pl.BlockSpec((1, N), lambda i: (0, 0))       # bias (resident)
    o_spec = pl.BlockSpec((tm, N), lambda i: (i, 0))      # lane-dense output
    common = dict(
        out_shape=jax.ShapeDtypeStruct((m_pad, N), jnp.float32),
        grid=grid,
        out_specs=o_spec,
        compiler_params=pltpu.CompilerParams(dimension_semantics=("parallel",)),
    )

    if add is None:
        out = pl.pallas_call(
            functools.partial(_mm_kernel, apply_relu=apply_relu),
            in_specs=[a_spec, w_spec, b_spec],
            **common,
        )(a_bf, w_bf, b2)
    else:
        add_spec = pl.BlockSpec((tm, N), lambda i: (i, 0))
        out = pl.pallas_call(
            functools.partial(_mm_add_kernel, apply_relu=apply_relu),
            in_specs=[a_spec, w_spec, b_spec, add_spec],
            **common,
        )(a_bf, w_bf, b2, add.astype(jnp.float32))

    return out[:M]


# -----------------------------------------------------------------------------
# Conv via im2col (glue) + Pallas matmul (hot path)
# -----------------------------------------------------------------------------
def _im2col(x, kh, kw, stride, padding):
    """x: (N, H, W, C) -> patches (N*Ho*Wo, kh*kw*C)."""
    N, H, W, C = x.shape
    xp = jnp.pad(x, ((0, 0), (padding, padding), (padding, padding), (0, 0)))
    Ho = (H + 2 * padding - kh) // stride + 1
    Wo = (W + 2 * padding - kw) // stride + 1
    cols = []
    for i in range(kh):
        for j in range(kw):
            cols.append(
                xp[:, i:i + (Ho - 1) * stride + 1:stride,
                      j:j + (Wo - 1) * stride + 1:stride, :]
            )
    patches = jnp.stack(cols, axis=3)                    # (N, Ho, Wo, kh*kw, C)
    return patches.reshape(N * Ho * Wo, kh * kw * C), (N, Ho, Wo)


def _pad_weight_bias(w2d, b, cout):
    cpad = _round_up(cout, _LANE)
    wp = jnp.pad(w2d, ((0, 0), (0, cpad - cout)))
    bp = jnp.pad(b, (0, cpad - cout))
    return wp, bp, cpad


def conv2d(x, w, b, stride=1, padding=0, relu=False, add_flat=None):
    """x: (N,H,W,Cin); w: (kh,kw,Cin,Cout); b: (Cout,). Returns (N,Ho,Wo,Cout)."""
    kh, kw, cin, cout = w.shape
    patches, (N, Ho, Wo) = _im2col(x, kh, kw, stride, padding)
    wm, bp, cpad = _pad_weight_bias(w.reshape(kh * kw * cin, cout), b, cout)
    if add_flat is not None and add_flat.shape[1] != cpad:
        add_flat = jnp.pad(add_flat, ((0, 0), (0, cpad - add_flat.shape[1])))
    out = _fused_matmul(patches, wm, bp, add=add_flat, apply_relu=relu)
    return out[:, :cout].reshape(N, Ho, Wo, cout)


def conv2d_multi(xs, ws, bs, stride=1, padding=1, relu=False):
    """Apply per-level convs (same kh/kw/Cin/Cout, different weights) to a list
    of NHWC tensors with ONE pallas_call (grid axis over levels)."""
    L = len(xs)
    kh, kw, cin, cout = ws[0].shape
    K = kh * kw * cin
    cpad = _round_up(cout, _LANE)

    patch_list, shapes = [], []
    for x in xs:
        p, shp = _im2col(x, kh, kw, stride, padding)
        patch_list.append(p)
        shapes.append(shp)

    tm = _round_up(max(p.shape[0] for p in patch_list), 8)
    a = jnp.stack([jnp.pad(p, ((0, tm - p.shape[0]), (0, 0))) for p in patch_list])
    w = jnp.stack([jnp.pad(wi.reshape(K, cout), ((0, 0), (0, cpad - cout))) for wi in ws])
    b = jnp.stack([jnp.pad(bi, (0, cpad - cout)).reshape(1, cpad) for bi in bs])

    out = pl.pallas_call(
        functools.partial(_mm_kernel, apply_relu=relu),
        out_shape=jax.ShapeDtypeStruct((L, tm, cpad), jnp.float32),
        grid=(L,),
        in_specs=[
            pl.BlockSpec((None, tm, K), lambda i: (i, 0, 0)),     # level activations
            pl.BlockSpec((None, K, cpad), lambda i: (i, 0, 0)),   # level weight
            pl.BlockSpec((None, 1, cpad), lambda i: (i, 0, 0)),   # level bias
        ],
        out_specs=pl.BlockSpec((None, tm, cpad), lambda i: (i, 0, 0)),
        compiler_params=pltpu.CompilerParams(dimension_semantics=("parallel",)),
    )(a.astype(jnp.bfloat16), w.astype(jnp.bfloat16), b.astype(jnp.float32))

    results = []
    for lvl, (N, Ho, Wo) in enumerate(shapes):
        sz = N * Ho * Wo
        results.append(out[lvl, :sz, :cout].reshape(N, Ho, Wo, cout))
    return results


def _upsample_nearest(x, out_h, out_w):
    """Torch F.interpolate(mode='nearest') semantics; x: (N,h,w,C)."""
    _, h, w, _ = x.shape
    hi = (jnp.arange(out_h) * h) // out_h
    wi = (jnp.arange(out_w) * w) // out_w
    return x[:, hi][:, :, wi]


# -----------------------------------------------------------------------------
# Parameters (deterministic, synthetic)
# -----------------------------------------------------------------------------
IN_CHANNELS = 4
BODY_CHANNELS = [8, 16, 32]          # in_channels_list fed to the FPN
OUT_CHANNELS = 16                    # FPN out_channels


def init_params(key):
    p = {}
    keys = iter(jax.random.split(key, 2 * len(BODY_CHANNELS) + 4 * len(BODY_CHANNELS)))

    # synthetic backbone: 3 stages of 3x3 stride-2 conv + ReLU
    cin = IN_CHANNELS
    for lvl, cout in enumerate(BODY_CHANNELS):
        p[f"body_w{lvl}"] = 0.1 * jax.random.normal(next(keys), (3, 3, cin, cout), jnp.float32)
        p[f"body_b{lvl}"] = 0.01 * jax.random.normal(next(keys), (cout,), jnp.float32)
        cin = cout

    # FPN: inner_blocks = 1x1 convs, layer_blocks = 3x3 convs (bias=True, no norm)
    for lvl, c in enumerate(BODY_CHANNELS):
        p[f"inner_w{lvl}"] = 0.1 * jax.random.normal(next(keys), (1, 1, c, OUT_CHANNELS), jnp.float32)
        p[f"inner_b{lvl}"] = 0.01 * jax.random.normal(next(keys), (OUT_CHANNELS,), jnp.float32)
        p[f"layer_w{lvl}"] = 0.1 * jax.random.normal(next(keys), (3, 3, OUT_CHANNELS, OUT_CHANNELS), jnp.float32)
        p[f"layer_b{lvl}"] = 0.01 * jax.random.normal(next(keys), (OUT_CHANNELS,), jnp.float32)
    return p


# -----------------------------------------------------------------------------
# Forward pass (BackboneWithFPN.forward)
# -----------------------------------------------------------------------------
def backbone_with_fpn_forward(params, x_nchw):
    # to NHWC
    x = jnp.transpose(x_nchw, (0, 2, 3, 1)).astype(jnp.float32)

    # --- body: multi-scale feature extractor ---
    feats = []
    h = x
    for lvl in range(len(BODY_CHANNELS)):
        h = conv2d(h, params[f"body_w{lvl}"], params[f"body_b{lvl}"],
                   stride=2, padding=1, relu=True)
        feats.append(h)

    # --- FPN (torchvision FeaturePyramidNetwork semantics) ---
    n = len(feats)
    inners = [None] * n
    last_inner = conv2d(feats[n - 1], params[f"inner_w{n-1}"], params[f"inner_b{n-1}"])
    inners[n - 1] = last_inner
    for idx in range(n - 2, -1, -1):
        Nb, Hf, Wf, _ = feats[idx].shape
        top_down = _upsample_nearest(last_inner, Hf, Wf)          # glue (indexing)
        add_flat = top_down.reshape(Nb * Hf * Wf, OUT_CHANNELS)
        # lateral 1x1 conv with the top-down add fused into the Pallas kernel
        last_inner = conv2d(feats[idx], params[f"inner_w{idx}"], params[f"inner_b{idx}"],
                            add_flat=add_flat)
        inners[idx] = last_inner

    # all three layer_blocks (3x3 output convs) in a single pallas_call
    results = conv2d_multi(
        inners,
        [params[f"layer_w{i}"] for i in range(n)],
        [params[f"layer_b{i}"] for i in range(n)],
        stride=1, padding=1)

    # --- extra_blocks = LastLevelMaxPool: max_pool2d(x, 1, 2, 0) == stride-2 subsample ---
    pool = results[-1][:, ::2, ::2, :]                            # glue (indexing, k=1 pool)
    results.append(pool)

    names = [str(i) for i in range(n)] + ["pool"]
    # back to NCHW, matching the PyTorch OrderedDict output
    return {name: jnp.transpose(r, (0, 3, 1, 2)) for name, r in zip(names, results)}


# -----------------------------------------------------------------------------
if __name__ == "__main__":
    key = jax.random.PRNGKey(0)
    pkey, xkey = jax.random.split(key)
    params = init_params(pkey)

    x = jax.random.normal(xkey, (2, IN_CHANNELS, 16, 16), jnp.float32)  # NCHW input

    out = jax.jit(backbone_with_fpn_forward)(params, x)
    out = jax.block_until_ready(out)

    expected = {
        "0": (2, OUT_CHANNELS, 8, 8),
        "1": (2, OUT_CHANNELS, 4, 4),
        "2": (2, OUT_CHANNELS, 2, 2),
        "pool": (2, OUT_CHANNELS, 1, 1),
    }
    for name, shape in expected.items():
        assert out[name].shape == shape, (name, out[name].shape, shape)
        assert bool(jnp.all(jnp.isfinite(out[name])))

    print("KERNEL_OK")
</pallas_src>

<mosaic_0001>
module attributes {stable_mosaic.version = 11 : i64} {
  func.func @_mm_kernel(%arg0: i32, %arg1: memref<128x36xbf16, #tpu.memory_space<vmem>>, %arg2: memref<36x128xbf16, #tpu.memory_space<vmem>>, %arg3: memref<1x128xf32, #tpu.memory_space<vmem>>, %arg4: memref<128x128xf32, #tpu.memory_space<vmem>>) attributes {dimension_semantics = [#tpu.dimension_semantics<parallel>], iteration_bounds = array<i64: 1>, scalar_prefetch = 0 : i64, scratch_operands = 0 : i64, tpu.core_type = #tpu.core_type<tc>, window_params = [{transform_indices = @transform_0, window_bounds = array<i64: 128, 36>}, {pipeline_mode = #tpu.pipeline_mode<synchronous>, transform_indices = @transform_1, window_bounds = array<i64: 36, 128>}, {pipeline_mode = #tpu.pipeline_mode<synchronous>, transform_indices = @transform_2, window_bounds = array<i64: 1, 128>}, {transform_indices = @transform_3, window_bounds = array<i64: 128, 128>}]} {
    %c0 = arith.constant 0 : index
    %c0_0 = arith.constant 0 : index
    %0 = vector.load %arg1[%c0, %c0_0] : memref<128x36xbf16, #tpu.memory_space<vmem>>, vector<128x36xbf16>
    %c0_1 = arith.constant 0 : index
    %c0_2 = arith.constant 0 : index
    %1 = vector.load %arg2[%c0_1, %c0_2] : memref<36x128xbf16, #tpu.memory_space<vmem>>, vector<36x128xbf16>
    %cst = arith.constant dense<0.000000e+00> : vector<128x128xf32>
    %2 = tpu.matmul %0, %1, %cst {dimension_numbers = #tpu.dot_dimension_numbers<[1], [0], [0], [1], [0, 0, 1, 1], [], []>} : vector<128x36xbf16>, vector<36x128xbf16>, vector<128x128xf32> -> vector<128x128xf32>
    %c0_3 = arith.constant 0 : index
    %c0_4 = arith.constant 0 : index
    %3 = vector.load %arg3[%c0_3, %c0_4] : memref<1x128xf32, #tpu.memory_space<vmem>>, vector<1x128xf32>
    %4 = vector.broadcast %3 : vector<1x128xf32> to vector<128x128xf32>
    %5 = arith.addf %2, %4 : vector<128x128xf32>
    %cst_5 = arith.constant 0.000000e+00 : f32
    %6 = vector.broadcast %cst_5 : f32 to vector<128x128xf32>
    %7 = arith.maximumf %5, %6 : vector<128x128xf32>
    %c0_6 = arith.constant 0 : index
    %c0_7 = arith.constant 0 : index
    %8 = vector.load %arg4[%c0_6, %c0_7] : memref<128x128xf32, #tpu.memory_space<vmem>>, vector<128x128xf32>
    tpu.vector_store %arg4[%c0_6, %c0_7], %7 {strides = array<i32>} : memref<128x128xf32, #tpu.memory_space<vmem>>, vector<128x128xf32>,
    return
  }
  func.func @transform_0(%arg0: i32) -> (i32, i32) {
    %c0_i32 = arith.constant 0 : i32
    %c0_i32_0 = arith.constant 0 : i32
    return %arg0, %c0_i32 : i32, i32
  }
  func.func @transform_1(%arg0: i32) -> (i32, i32) {
    %c0_i32 = arith.constant 0 : i32
    %c0_i32_0 = arith.constant 0 : i32
    %c0_i32_1 = arith.constant 0 : i32
    return %c0_i32, %c0_i32_0 : i32, i32
  }
  func.func @transform_2(%arg0: i32) -> (i32, i32) {
    %c0_i32 = arith.constant 0 : i32
    %c0_i32_0 = arith.constant 0 : i32
    %c0_i32_1 = arith.constant 0 : i32
    return %c0_i32, %c0_i32_0 : i32, i32
  }
  func.func @transform_3(%arg0: i32) -> (i32, i32) {
    %c0_i32 = arith.constant 0 : i32
    %c0_i32_0 = arith.constant 0 : i32
    return %arg0, %c0_i32 : i32, i32
  }
}

module attributes {stable_mosaic.version = 11 : i64} {
  func.func @_mm_kernel(%arg0: i32, %arg1: memref<32x72xbf16, #tpu.memory_space<vmem>>, %arg2: memref<72x128xbf16, #tpu.memory_space<vmem>>, %arg3: memref<1x128xf32, #tpu.memory_space<vmem>>, %arg4: memref<32x128xf32, #tpu.memory_space<vmem>>) attributes {dimension_semantics = [#tpu.dimension_semantics<parallel>], iteration_bounds = array<i64: 1>, scalar_prefetch = 0 : i64, scratch_operands = 0 : i64, tpu.core_type = #tpu.core_type<tc>, window_params = [{transform_indices = @transform_0, window_bounds = array<i64: 32, 72>}, {pipeline_mode = #tpu.pipeline_mode<synchronous>, transform_indices = @transform_1, window_bounds = array<i64: 72, 128>}, {pipeline_mode = #tpu.pipeline_mode<synchronous>, transform_indices = @transform_2, window_bounds = array<i64: 1, 128>}, {transform_indices = @transform_3, window_bounds = array<i64: 32, 128>}]} {
    %c0 = arith.constant 0 : index
    %c0_0 = arith.constant 0 : index
    %0 = vector.load %arg1[%c0, %c0_0] : memref<32x72xbf16, #tpu.memory_space<vmem>>, vector<32x72xbf16>
    %c0_1 = arith.constant 0 : index
    %c0_2 = arith.constant 0 : index
    %1 = vector.load %arg2[%c0_1, %c0_2] : memref<72x128xbf16, #tpu.memory_space<vmem>>, vector<72x128xbf16>
    %cst = arith.constant dense<0.000000e+00> : vector<32x128xf32>
    %2 = tpu.matmul %0, %1, %cst {dimension_numbers = #tpu.dot_dimension_numbers<[1], [0], [0], [1], [0, 0, 1, 1], [], []>} : vector<32x72xbf16>, vector<72x128xbf16>, vector<32x128xf32> -> vector<32x128xf32>
    %c0_3 = arith.constant 0 : index
    %c0_4 = arith.constant 0 : index
    %3 = vector.load %arg3[%c0_3, %c0_4] : memref<1x128xf32, #tpu.memory_space<vmem>>, vector<1x128xf32>
    %4 = vector.broadcast %3 : vector<1x128xf32> to vector<32x128xf32>
    %5 = arith.addf %2, %4 : vector<32x128xf32>
    %cst_5 = arith.constant 0.000000e+00 : f32
    %6 = vector.broadcast %cst_5 : f32 to vector<32x128xf32>
    %7 = arith.maximumf %5, %6 : vector<32x128xf32>
    %c0_6 = arith.constant 0 : index
    %c0_7 = arith.constant 0 : index
    %8 = vector.load %arg4[%c0_6, %c0_7] : memref<32x128xf32, #tpu.memory_space<vmem>>, vector<32x128xf32>
    tpu.vector_store %arg4[%c0_6, %c0_7], %7 {strides = array<i32>} : memref<32x128xf32, #tpu.memory_space<vmem>>, vector<32x128xf32>,
    return
  }
  func.func @transform_0(%arg0: i32) -> (i32, i32) {
    %c0_i32 = arith.constant 0 : i32
    %c0_i32_0 = arith.constant 0 : i32
    return %arg0, %c0_i32 : i32, i32
  }
  func.func @transform_1(%arg0: i32) -> (i32, i32) {
    %c0_i32 = arith.constant 0 : i32
    %c0_i32_0 = arith.constant 0 : i32
    %c0_i32_1 = arith.constant 0 : i32
    return %c0_i32, %c0_i32_0 : i32, i32
  }
  func.func @transform_2(%arg0: i32) -> (i32, i32) {
    %c0_i32 = arith.constant 0 : i32
    %c0_i32_0 = arith.constant 0 : i32
    %c0_i32_1 = arith.constant 0 : i32
    return %c0_i32, %c0_i32_0 : i32, i32
  }
  func.func @transform_3(%arg0: i32) -> (i32, i32) {
    %c0_i32 = arith.constant 0 : i32
    %c0_i32_0 = arith.constant 0 : i32
    return %arg0, %c0_i32 : i32, i32
  }
}

module attributes {stable_mosaic.version = 11 : i64} {
  func.func @_mm_kernel(%arg0: i32, %arg1: memref<8x32xbf16, #tpu.memory_space<vmem>>, %arg2: memref<32x128xbf16, #tpu.memory_space<vmem>>, %arg3: memref<1x128xf32, #tpu.memory_space<vmem>>, %arg4: memref<8x128xf32, #tpu.memory_space<vmem>>) attributes {dimension_semantics = [#tpu.dimension_semantics<parallel>], iteration_bounds = array<i64: 1>, scalar_prefetch = 0 : i64, scratch_operands = 0 : i64, tpu.core_type = #tpu.core_type<tc>, window_params = [{transform_indices = @transform_0, window_bounds = array<i64: 8, 32>}, {pipeline_mode = #tpu.pipeline_mode<synchronous>, transform_indices = @transform_1, window_bounds = array<i64: 32, 128>}, {pipeline_mode = #tpu.pipeline_mode<synchronous>, transform_indices = @transform_2, window_bounds = array<i64: 1, 128>}, {transform_indices = @transform_3, window_bounds = array<i64: 8, 128>}]} {
    %c0 = arith.constant 0 : index
    %c0_0 = arith.constant 0 : index
    %0 = vector.load %arg1[%c0, %c0_0] : memref<8x32xbf16, #tpu.memory_space<vmem>>, vector<8x32xbf16>
    %c0_1 = arith.constant 0 : index
    %c0_2 = arith.constant 0 : index
    %1 = vector.load %arg2[%c0_1, %c0_2] : memref<32x128xbf16, #tpu.memory_space<vmem>>, vector<32x128xbf16>
    %cst = arith.constant dense<0.000000e+00> : vector<8x128xf32>
    %2 = tpu.matmul %0, %1, %cst {dimension_numbers = #tpu.dot_dimension_numbers<[1], [0], [0], [1], [0, 0, 1, 1], [], []>} : vector<8x32xbf16>, vector<32x128xbf16>, vector<8x128xf32> -> vector<8x128xf32>
    %c0_3 = arith.constant 0 : index
    %c0_4 = arith.constant 0 : index
    %3 = vector.load %arg3[%c0_3, %c0_4] : memref<1x128xf32, #tpu.memory_space<vmem>>, vector<1x128xf32>
    %4 = vector.broadcast %3 : vector<1x128xf32> to vector<8x128xf32>
    %5 = arith.addf %2, %4 : vector<8x128xf32>
    %c0_5 = arith.constant 0 : index
    %c0_6 = arith.constant 0 : index
    %6 = vector.load %arg4[%c0_5, %c0_6] : memref<8x128xf32, #tpu.memory_space<vmem>>, vector<8x128xf32>
    tpu.vector_store %arg4[%c0_5, %c0_6], %5 {strides = array<i32>} : memref<8x128xf32, #tpu.memory_space<vmem>>, vector<8x128xf32>,
    return
  }
  func.func @transform_0(%arg0: i32) -> (i32, i32) {
    %c0_i32 = arith.constant 0 : i32
    %c0_i32_0 = arith.constant 0 : i32
    return %arg0, %c0_i32 : i32, i32
  }
  func.func @transform_1(%arg0: i32) -> (i32, i32) {
    %c0_i32 = arith.constant 0 : i32
    %c0_i32_0 = arith.constant 0 : i32
    %c0_i32_1 = arith.constant 0 : i32
    return %c0_i32, %c0_i32_0 : i32, i32
  }
  func.func @transform_2(%arg0: i32) -> (i32, i32) {
    %c0_i32 = arith.constant 0 : i32
    %c0_i32_0 = arith.constant 0 : i32
    %c0_i32_1 = arith.constant 0 : i32
    return %c0_i32, %c0_i32_0 : i32, i32
  }
  func.func @transform_3(%arg0: i32) -> (i32, i32) {
    %c0_i32 = arith.constant 0 : i32
    %c0_i32_0 = arith.constant 0 : i32
    return %arg0, %c0_i32 : i32, i32
  }
}

module attributes {stable_mosaic.version = 11 : i64} {
  func.func @_mm_kernel(%arg0: i32, %arg1: memref<8x144xbf16, #tpu.memory_space<vmem>>, %arg2: memref<144x128xbf16, #tpu.memory_space<vmem>>, %arg3: memref<1x128xf32, #tpu.memory_space<vmem>>, %arg4: memref<8x128xf32, #tpu.memory_space<vmem>>) attributes {dimension_semantics = [#tpu.dimension_semantics<parallel>], iteration_bounds = array<i64: 1>, scalar_prefetch = 0 : i64, scratch_operands = 0 : i64, tpu.core_type = #tpu.core_type<tc>, window_params = [{transform_indices = @transform_0, window_bounds = array<i64: 8, 144>}, {pipeline_mode = #tpu.pipeline_mode<synchronous>, transform_indices = @transform_1, window_bounds = array<i64: 144, 128>}, {pipeline_mode = #tpu.pipeline_mode<synchronous>, transform_indices = @transform_2, window_bounds = array<i64: 1, 128>}, {transform_indices = @transform_3, window_bounds = array<i64: 8, 128>}]} {
    %c0 = arith.constant 0 : index
    %c0_0 = arith.constant 0 : index
    %0 = vector.load %arg1[%c0, %c0_0] : memref<8x144xbf16, #tpu.memory_space<vmem>>, vector<8x144xbf16>
    %c0_1 = arith.constant 0 : index
    %c0_2 = arith.constant 0 : index
    %1 = vector.load %arg2[%c0_1, %c0_2] : memref<144x128xbf16, #tpu.memory_space<vmem>>, vector<144x128xbf16>
    %cst = arith.constant dense<0.000000e+00> : vector<8x128xf32>
    %2 = tpu.matmul %0, %1, %cst {dimension_numbers = #tpu.dot_dimension_numbers<[1], [0], [0], [1], [0, 0, 1, 1], [], []>} : vector<8x144xbf16>, vector<144x128xbf16>, vector<8x128xf32> -> vector<8x128xf32>
    %c0_3 = arith.constant 0 : index
    %c0_4 = arith.constant 0 : index
    %3 = vector.load %arg3[%c0_3, %c0_4] : memref<1x128xf32, #tpu.memory_space<vmem>>, vector<1x128xf32>
    %4 = vector.broadcast %3 : vector<1x128xf32> to vector<8x128xf32>
    %5 = arith.addf %2, %4 : vector<8x128xf32>
    %cst_5 = arith.constant 0.000000e+00 : f32
    %6 = vector.broadcast %cst_5 : f32 to vector<8x128xf32>
    %7 = arith.maximumf %5, %6 : vector<8x128xf32>
    %c0_6 = arith.constant 0 : index
    %c0_7 = arith.constant 0 : index
    %8 = vector.load %arg4[%c0_6, %c0_7] : memref<8x128xf32, #tpu.memory_space<vmem>>, vector<8x128xf32>
    tpu.vector_store %arg4[%c0_6, %c0_7], %7 {strides = array<i32>} : memref<8x128xf32, #tpu.memory_space<vmem>>, vector<8x128xf32>,
    return
  }
  func.func @transform_0(%arg0: i32) -> (i32, i32) {
    %c0_i32 = arith.constant 0 : i32
    %c0_i32_0 = arith.constant 0 : i32
    return %arg0, %c0_i32 : i32, i32
  }
  func.func @transform_1(%arg0: i32) -> (i32, i32) {
    %c0_i32 = arith.constant 0 : i32
    %c0_i32_0 = arith.constant 0 : i32
    %c0_i32_1 = arith.constant 0 : i32
    return %c0_i32, %c0_i32_0 : i32, i32
  }
  func.func @transform_2(%arg0: i32) -> (i32, i32) {
    %c0_i32 = arith.constant 0 : i32
    %c0_i32_0 = arith.constant 0 : i32
    %c0_i32_1 = arith.constant 0 : i32
    return %c0_i32, %c0_i32_0 : i32, i32
  }
  func.func @transform_3(%arg0: i32) -> (i32, i32) {
    %c0_i32 = arith.constant 0 : i32
    %c0_i32_0 = arith.constant 0 : i32
    return %arg0, %c0_i32 : i32, i32
  }
}

module attributes {stable_mosaic.version = 11 : i64} {
  func.func @_mm_add_kernel(%arg0: i32, %arg1: memref<32x16xbf16, #tpu.memory_space<vmem>>, %arg2: memref<16x128xbf16, #tpu.memory_space<vmem>>, %arg3: memref<1x128xf32, #tpu.memory_space<vmem>>, %arg4: memref<32x128xf32, #tpu.memory_space<vmem>>, %arg5: memref<32x128xf32, #tpu.memory_space<vmem>>) attributes {dimension_semantics = [#tpu.dimension_semantics<parallel>], iteration_bounds = array<i64: 1>, scalar_prefetch = 0 : i64, scratch_operands = 0 : i64, tpu.core_type = #tpu.core_type<tc>, window_params = [{transform_indices = @transform_0, window_bounds = array<i64: 32, 16>}, {pipeline_mode = #tpu.pipeline_mode<synchronous>, transform_indices = @transform_1, window_bounds = array<i64: 16, 128>}, {pipeline_mode = #tpu.pipeline_mode<synchronous>, transform_indices = @transform_2, window_bounds = array<i64: 1, 128>}, {transform_indices = @transform_3, window_bounds = array<i64: 32, 128>}, {transform_indices = @transform_4, window_bounds = array<i64: 32, 128>}]} {
    %c0 = arith.constant 0 : index
    %c0_0 = arith.constant 0 : index
    %0 = vector.load %arg1[%c0, %c0_0] : memref<32x16xbf16, #tpu.memory_space<vmem>>, vector<32x16xbf16>
    %c0_1 = arith.constant 0 : index
    %c0_2 = arith.constant 0 : index
    %1 = vector.load %arg2[%c0_1, %c0_2] : memref<16x128xbf16, #tpu.memory_space<vmem>>, vector<16x128xbf16>
    %cst = arith.constant dense<0.000000e+00> : vector<32x128xf32>
    %2 = tpu.matmul %0, %1, %cst {dimension_numbers = #tpu.dot_dimension_numbers<[1], [0], [0], [1], [0, 0, 1, 1], [], []>} : vector<32x16xbf16>, vector<16x128xbf16>, vector<32x128xf32> -> vector<32x128xf32>
    %c0_3 = arith.constant 0 : index
    %c0_4 = arith.constant 0 : index
    %3 = vector.load %arg3[%c0_3, %c0_4] : memref<1x128xf32, #tpu.memory_space<vmem>>, vector<1x128xf32>
    %4 = vector.broadcast %3 : vector<1x128xf32> to vector<32x128xf32>
    %5 = arith.addf %2, %4 : vector<32x128xf32>
    %c0_5 = arith.constant 0 : index
    %c0_6 = arith.constant 0 : index
    %6 = vector.load %arg4[%c0_5, %c0_6] : memref<32x128xf32, #tpu.memory_space<vmem>>, vector<32x128xf32>
    %7 = arith.addf %5, %6 : vector<32x128xf32>
    %c0_7 = arith.constant 0 : index
    %c0_8 = arith.constant 0 : index
    %8 = vector.load %arg5[%c0_7, %c0_8] : memref<32x128xf32, #tpu.memory_space<vmem>>, vector<32x128xf32>
    tpu.vector_store %arg5[%c0_7, %c0_8], %7 {strides = array<i32>} : memref<32x128xf32, #tpu.memory_space<vmem>>, vector<32x128xf32>,
    return
  }
  func.func @transform_0(%arg0: i32) -> (i32, i32) {
    %c0_i32 = arith.constant 0 : i32
    %c0_i32_0 = arith.constant 0 : i32
    return %arg0, %c0_i32 : i32, i32
  }
  func.func @transform_1(%arg0: i32) -> (i32, i32) {
    %c0_i32 = arith.constant 0 : i32
    %c0_i32_0 = arith.constant 0 : i32
    %c0_i32_1 = arith.constant 0 : i32
    return %c0_i32, %c0_i32_0 : i32, i32
  }
  func.func @transform_2(%arg0: i32) -> (i32, i32) {
    %c0_i32 = arith.constant 0 : i32
    %c0_i32_0 = arith.constant 0 : i32
    %c0_i32_1 = arith.constant 0 : i32
    return %c0_i32, %c0_i32_0 : i32, i32
  }
  func.func @transform_3(%arg0: i32) -> (i32, i32) {
    %c0_i32 = arith.constant 0 : i32
    %c0_i32_0 = arith.constant 0 : i32
    return %arg0, %c0_i32 : i32, i32
  }
  func.func @transform_4(%arg0: i32) -> (i32, i32) {
    %c0_i32 = arith.constant 0 : i32
    %c0_i32_0 = arith.constant 0 : i32
    return %arg0, %c0_i32 : i32, i32
  }
}

module attributes {stable_mosaic.version = 11 : i64} {
  func.func @_mm_add_kernel(%arg0: i32, %arg1: memref<128x8xbf16, #tpu.memory_space<vmem>>, %arg2: memref<8x128xbf16, #tpu.memory_space<vmem>>, %arg3: memref<1x128xf32, #tpu.memory_space<vmem>>, %arg4: memref<128x128xf32, #tpu.memory_space<vmem>>, %arg5: memref<128x128xf32, #tpu.memory_space<vmem>>) attributes {dimension_semantics = [#tpu.dimension_semantics<parallel>], iteration_bounds = array<i64: 1>, scalar_prefetch = 0 : i64, scratch_operands = 0 : i64, tpu.core_type = #tpu.core_type<tc>, window_params = [{transform_indices = @transform_0, window_bounds = array<i64: 128, 8>}, {pipeline_mode = #tpu.pipeline_mode<synchronous>, transform_indices = @transform_1, window_bounds = array<i64: 8, 128>}, {pipeline_mode = #tpu.pipeline_mode<synchronous>, transform_indices = @transform_2, window_bounds = array<i64: 1, 128>}, {transform_indices = @transform_3, window_bounds = array<i64: 128, 128>}, {transform_indices = @transform_4, window_bounds = array<i64: 128, 128>}]} {
    %c0 = arith.constant 0 : index
    %c0_0 = arith.constant 0 : index
    %0 = vector.load %arg1[%c0, %c0_0] : memref<128x8xbf16, #tpu.memory_space<vmem>>, vector<128x8xbf16>
    %c0_1 = arith.constant 0 : index
    %c0_2 = arith.constant 0 : index
    %1 = vector.load %arg2[%c0_1, %c0_2] : memref<8x128xbf16, #tpu.memory_space<vmem>>, vector<8x128xbf16>
    %cst = arith.constant dense<0.000000e+00> : vector<128x128xf32>
    %2 = tpu.matmul %0, %1, %cst {dimension_numbers = #tpu.dot_dimension_numbers<[1], [0], [0], [1], [0, 0, 1, 1], [], []>} : vector<128x8xbf16>, vector<8x128xbf16>, vector<128x128xf32> -> vector<128x128xf32>
    %c0_3 = arith.constant 0 : index
    %c0_4 = arith.constant 0 : index
    %3 = vector.load %arg3[%c0_3, %c0_4] : memref<1x128xf32, #tpu.memory_space<vmem>>, vector<1x128xf32>
    %4 = vector.broadcast %3 : vector<1x128xf32> to vector<128x128xf32>
    %5 = arith.addf %2, %4 : vector<128x128xf32>
    %c0_5 = arith.constant 0 : index
    %c0_6 = arith.constant 0 : index
    %6 = vector.load %arg4[%c0_5, %c0_6] : memref<128x128xf32, #tpu.memory_space<vmem>>, vector<128x128xf32>
    %7 = arith.addf %5, %6 : vector<128x128xf32>
    %c0_7 = arith.constant 0 : index
    %c0_8 = arith.constant 0 : index
    %8 = vector.load %arg5[%c0_7, %c0_8] : memref<128x128xf32, #tpu.memory_space<vmem>>, vector<128x128xf32>
    tpu.vector_store %arg5[%c0_7, %c0_8], %7 {strides = array<i32>} : memref<128x128xf32, #tpu.memory_space<vmem>>, vector<128x128xf32>,
    return
  }
  func.func @transform_0(%arg0: i32) -> (i32, i32) {
    %c0_i32 = arith.constant 0 : i32
    %c0_i32_0 = arith.constant 0 : i32
    return %arg0, %c0_i32 : i32, i32
  }
  func.func @transform_1(%arg0: i32) -> (i32, i32) {
    %c0_i32 = arith.constant 0 : i32
    %c0_i32_0 = arith.constant 0 : i32
    %c0_i32_1 = arith.constant 0 : i32
    return %c0_i32, %c0_i32_0 : i32, i32
  }
  func.func @transform_2(%arg0: i32) -> (i32, i32) {
    %c0_i32 = arith.constant 0 : i32
    %c0_i32_0 = arith.constant 0 : i32
    %c0_i32_1 = arith.constant 0 : i32
    return %c0_i32, %c0_i32_0 : i32, i32
  }
  func.func @transform_3(%arg0: i32) -> (i32, i32) {
    %c0_i32 = arith.constant 0 : i32
    %c0_i32_0 = arith.constant 0 : i32
    return %arg0, %c0_i32 : i32, i32
  }
  func.func @transform_4(%arg0: i32) -> (i32, i32) {
    %c0_i32 = arith.constant 0 : i32
    %c0_i32_0 = arith.constant 0 : i32
    return %arg0, %c0_i32 : i32, i32
  }
}

module attributes {stable_mosaic.version = 11 : i64} {
  func.func @_mm_kernel(%arg0: i32, %arg1: memref<1x128x144xbf16, #tpu.memory_space<vmem>>, %arg2: memref<1x144x128xbf16, #tpu.memory_space<vmem>>, %arg3: memref<1x1x128xf32, #tpu.memory_space<vmem>>, %arg4: memref<1x128x128xf32, #tpu.memory_space<vmem>>) attributes {dimension_semantics = [#tpu.dimension_semantics<parallel>], iteration_bounds = array<i64: 3>, scalar_prefetch = 0 : i64, scratch_operands = 0 : i64, tpu.core_type = #tpu.core_type<tc>, window_params = [{transform_indices = @transform_0, window_bounds = array<i64: 1, 128, 144>}, {transform_indices = @transform_1, window_bounds = array<i64: 1, 144, 128>}, {transform_indices = @transform_2, window_bounds = array<i64: 1, 1, 128>}, {transform_indices = @transform_3, window_bounds = array<i64: 1, 128, 128>}]} {
    %c0 = arith.constant 0 : index
    %c0_0 = arith.constant 0 : index
    %c0_1 = arith.constant 0 : index
    %0 = vector.load %arg1[%c0, %c0_0, %c0_1] : memref<1x128x144xbf16, #tpu.memory_space<vmem>>, vector<1x128x144xbf16>
    %1 = vector.shape_cast %0 : vector<1x128x144xbf16> to vector<128x144xbf16>
    %c0_2 = arith.constant 0 : index
    %c0_3 = arith.constant 0 : index
    %c0_4 = arith.constant 0 : index
    %2 = vector.load %arg2[%c0_2, %c0_3, %c0_4] : memref<1x144x128xbf16, #tpu.memory_space<vmem>>, vector<1x144x128xbf16>
    %3 = vector.shape_cast %2 : vector<1x144x128xbf16> to vector<144x128xbf16>
    %cst = arith.constant dense<0.000000e+00> : vector<128x128xf32>
    %4 = tpu.matmul %1, %3, %cst {dimension_numbers = #tpu.dot_dimension_numbers<[1], [0], [0], [1], [0, 0, 1, 1], [], []>} : vector<128x144xbf16>, vector<144x128xbf16>, vector<128x128xf32> -> vector<128x128xf32>
    %c0_5 = arith.constant 0 : index
    %c0_6 = arith.constant 0 : index
    %c0_7 = arith.constant 0 : index
    %5 = vector.load %arg3[%c0_5, %c0_6, %c0_7] : memref<1x1x128xf32, #tpu.memory_space<vmem>>, vector<1x1x128xf32>
    %6 = vector.shape_cast %5 : vector<1x1x128xf32> to vector<1x128xf32>
    %7 = vector.broadcast %6 : vector<1x128xf32> to vector<128x128xf32>
    %8 = arith.addf %4, %7 : vector<128x128xf32>
    %c0_8 = arith.constant 0 : index
    %c0_9 = arith.constant 0 : index
    %c0_10 = arith.constant 0 : index
    %9 = vector.load %arg4[%c0_8, %c0_9, %c0_10] : memref<1x128x128xf32, #tpu.memory_space<vmem>>, vector<1x128x128xf32>
    %10 = vector.shape_cast %9 : vector<1x128x128xf32> to vector<128x128xf32>
    %11 = vector.shape_cast %8 : vector<128x128xf32> to vector<1x128x128xf32>
    tpu.vector_store %arg4[%c0_8, %c0_9, %c0_10], %11 {strides = array<i32>} : memref<1x128x128xf32, #tpu.memory_space<vmem>>, vector<1x128x128xf32>,
    return
  }
  func.func @transform_0(%arg0: i32) -> (i32, i32, i32) {
    %c0_i32 = arith.constant 0 : i32
    %c0_i32_0 = arith.constant 0 : i32
    %c0_i32_1 = arith.constant 0 : i32
    return %arg0, %c0_i32, %c0_i32_0 : i32, i32, i32
  }
  func.func @transform_1(%arg0: i32) -> (i32, i32, i32) {
    %c0_i32 = arith.constant 0 : i32
    %c0_i32_0 = arith.constant 0 : i32
    %c0_i32_1 = arith.constant 0 : i32
    return %arg0, %c0_i32, %c0_i32_0 : i32, i32, i32
  }
  func.func @transform_2(%arg0: i32) -> (i32, i32, i32) {
    %c0_i32 = arith.constant 0 : i32
    %c0_i32_0 = arith.constant 0 : i32
    %c0_i32_1 = arith.constant 0 : i32
    return %arg0, %c0_i32, %c0_i32_0 : i32, i32, i32
  }
  func.func @transform_3(%arg0: i32) -> (i32, i32, i32) {
    %c0_i32 = arith.constant 0 : i32
    %c0_i32_0 = arith.constant 0 : i32
    %c0_i32_1 = arith.constant 0 : i32
    return %arg0, %c0_i32, %c0_i32_0 : i32, i32, i32
  }
}

</mosaic_0001>

<llo_original>
// kernel: backbone_with_fpn_forward.7
$region0: #{backbone_with_fpn_forward.7}
  #allocation0 [shape = 'u32[]', space=smem, size = 0x4, offset = 0x4, fixed_abs, tag = 'smem constant byte address 0x4 - core index']
  #allocation1 [shape = 'u32[72,128]{1,0:T(1,128)}', space=vmem, size = 0x9000, scoped, tag = 'internal scratch']
  %s0 = inlined_call_operand.vmem [shape: bf16[128,36], index: 0, kind: input, shape index: {}]
  %s1 = inlined_call_operand.vmem [shape: bf16[36,128], index: 1, kind: input, shape index: {}]
  %s2 = inlined_call_operand.vmem [shape: f32[1,128], index: 2, kind: input, shape index: {}]
  %s3 = inlined_call_operand.vmem [shape: f32[128,128], index: 3, kind: output, shape index: {}]
  %s4 = sld [smem:[#allocation0]]
  $region22: #{backbone_with_fpn_forward.7} parent=0
    _
  %s6 = ssub.s32 1, %s4
  %s7 = scalar_select 0, %s6, %s4
  // Predicated region
  $region2: #{backbone_with_fpn_forward.7} parent=0 // pred_check
    _
  $region3: #{backbone_with_fpn_forward.7} parent=0 // pred_check_branch
    %9 = sbr.rel (0) target = $region5
  $region4: #{backbone_with_fpn_forward.7} parent=0 // pred_region
    _
  $region5: #{backbone_with_fpn_forward.7} parent=0 // pred_fallthru
    _
  // Predicated region
  $region6: #{backbone_with_fpn_forward.7} parent=0 // pred_check
    _
  $region7: #{backbone_with_fpn_forward.7} parent=0 // pred_check_branch
    %11 = sbr.rel (0) target = $region9
  $region8: #{backbone_with_fpn_forward.7} parent=0 // pred_region
    _
  $region9: #{backbone_with_fpn_forward.7} parent=0 // pred_fallthru
    _
  // Predicated region
  $region10: #{backbone_with_fpn_forward.7} parent=0 // pred_check
    _
  $region11: #{backbone_with_fpn_forward.7} parent=0 // pred_check_branch
    %13 = sbr.rel (0) target = $region13
  $region12: #{backbone_with_fpn_forward.7} parent=0 // pred_region
    _
  $region13: #{backbone_with_fpn_forward.7} parent=0 // pred_fallthru
    _
  %v15 = vld [vmem:[%s0] sm:$0xf]
  %v16 = vld [vmem:[%s0 + $0x4] sm:$0xf]
  %v17 = vld [vmem:[%s0 + $0x8] sm:$0xf]
  %v18 = vld [vmem:[%s0 + $0xc] sm:$0xf]
  %v19 = vld [vmem:[%s0 + $0x10] sm:$0xf]
  %v20 = vld [vmem:[%s0 + $0x14] sm:$0xf]
  %v21 = vld [vmem:[%s0 + $0x18] sm:$0xf]
  %v22 = vld [vmem:[%s0 + $0x1c] sm:$0xf]
  %v23 = vld [vmem:[%s0 + $0x20] sm:$0xf]
  %v24 = vld [vmem:[%s0 + $0x24] sm:$0xf]
  %v25 = vld [vmem:[%s0 + $0x28] sm:$0xf]
  %v26 = vld [vmem:[%s0 + $0x2c] sm:$0xf]
  %v27 = vld [vmem:[%s0 + $0x30] sm:$0xf]
  %v28 = vld [vmem:[%s0 + $0x34] sm:$0xf]
  %v29 = vld [vmem:[%s0 + $0x38] sm:$0xf]
  %v30 = vld [vmem:[%s0 + $0x3c] sm:$0xf]
  %v31 = vld [vmem:[%s1] sm:$0xf]
  %v32 = vld [vmem:[%s1 + $0x4] sm:$0xf]
  %v33 = vld [vmem:[%s1 + $0x8] sm:$0xf]
  %v34 = vld [vmem:[%s1 + $0xc] sm:$0xf]
  %v35 = vld [vmem:[%s1 + $0x10] sm:$0x3]
  %v36 = vld [vmem:[%s2] sm:$0x1]
  %v38 = vperm.slane %v36, 0
  %v56 = vunpack.c.l.b16 %v15
  %v57 = vunpack.c.l.b16 %v16
  %v58 = vunpack.c.l.b16 %v17
  %v59 = vunpack.c.l.b16 %v18
  %v60 = vunpack.c.l.b16 %v19
  %v61 = vunpack.c.l.b16 %v20
  %v62 = vunpack.c.l.b16 %v21
  %v63 = vunpack.c.l.b16 %v22
  %v64 = vunpack.c.l.b16 %v23
  %v65 = vunpack.c.l.b16 %v24
  %v66 = vunpack.c.l.b16 %v25
  %v67 = vunpack.c.l.b16 %v26
  %v68 = vunpack.c.l.b16 %v27
  %v69 = vunpack.c.l.b16 %v28
  %v70 = vunpack.c.l.b16 %v29
  %v71 = vunpack.c.l.b16 %v30
  %v72 = vpack.c.b16 %v57, %v56
  %v73 = vpack.c.b16 %v59, %v58
  %v74 = vpack.c.b16 %v61, %v60
  %v75 = vpack.c.b16 %v63, %v62
  %v76 = vpack.c.b16 %v65, %v64
  %v77 = vpack.c.b16 %v67, %v66
  %v78 = vpack.c.b16 %v69, %v68
  %v79 = vpack.c.b16 %v71, %v70
  %v85 = vunpack.c.l.b16 %v31
  %v86 = vunpack.c.l.b16 %v32
  %v87 = vunpack.c.l.b16 %v33
  %v88 = vunpack.c.l.b16 %v34
  %v89 = vunpack.c.l.b16 %v35
  %v90 = vpack.c.b16 %v86, %v85
  %v91 = vpack.c.b16 %v88, %v87
  %v92 = vpack.c.b16 %v89, %v89
  %vm95 = vcmask 293888
  %v97 = vsel %vm95, %v72, 0
  %v100 = vsel %vm95, %v73, 0
  %v103 = vsel %vm95, %v74, 0
  %v106 = vsel %vm95, %v75, 0
  %v109 = vsel %vm95, %v76, 0
  %v112 = vsel %vm95, %v77, 0
  %v115 = vsel %vm95, %v78, 0
  %v118 = vsel %vm95, %v79, 0
  %vm120 = vcmask 1041408
  %v122 = vsel %vm120, %v92, 0
  %124 = vmatpush.bf16.msra.mxu0 0
  %125 = vmatpush.bf16.msra.mxu0 0
  %126 = vmatpush.bf16.msra.mxu0 0
  %127 = vmatpush.bf16.msra.mxu0 0
  %128 = vmatpush.bf16.msra.mxu0 0
  %129 = vmatpush.bf16.msra.mxu0 %v122
  %130 = vmatpush.bf16.msra.mxu0 %v91
  %131 = vmatpush.bf16.msra.mxu0 %v90
  %132 = vmatmul.bf16.gmra.mxu0 %v97
  %v133 = vpop.f32.mrf.mxu0
  %v134 = vadd.f32 %v38, %v133
  %v135 = vpop.f32.mrf.mxu0
  %v136 = vadd.f32 %v38, %v135
  %137 = vmatmul.bf16.gmra.mxu0 %v100
  %v138 = vpop.f32.mrf.mxu0
  %v139 = vadd.f32 %v38, %v138
  %v140 = vpop.f32.mrf.mxu0
  %v141 = vadd.f32 %v38, %v140
  %142 = vmatmul.bf16.gmra.mxu0 %v103
  %v143 = vpop.f32.mrf.mxu0
  %v144 = vadd.f32 %v38, %v143
  %v145 = vpop.f32.mrf.mxu0
  %v146 = vadd.f32 %v38, %v145
  %147 = vmatmul.bf16.gmra.mxu0 %v106
  %v148 = vpop.f32.mrf.mxu0
  %v149 = vadd.f32 %v38, %v148
  %v150 = vpop.f32.mrf.mxu0
  %v151 = vadd.f32 %v38, %v150
  %152 = vmatmul.bf16.gmra.mxu0 %v109
  %v153 = vpop.f32.mrf.mxu0
  %v154 = vadd.f32 %v38, %v153
  %v155 = vpop.f32.mrf.mxu0
  %v156 = vadd.f32 %v38, %v155
  %157 = vmatmul.bf16.gmra.mxu0 %v112
  %v158 = vpop.f32.mrf.mxu0
  %v159 = vadd.f32 %v38, %v158
  %v160 = vpop.f32.mrf.mxu0
  %v161 = vadd.f32 %v38, %v160
  %162 = vmatmul.bf16.gmra.mxu0 %v115
  %v163 = vpop.f32.mrf.mxu0
  %v164 = vadd.f32 %v38, %v163
  %v165 = vpop.f32.mrf.mxu0
  %v166 = vadd.f32 %v38, %v165
  %167 = vmatmul.bf16.gmra.mxu0 %v118
  %v168 = vpop.f32.mrf.mxu0
  %v169 = vadd.f32 %v38, %v168
  %v170 = vpop.f32.mrf.mxu0
  %v171 = vadd.f32 %v38, %v170
  %172 = vdwg.mxu0
  %v173 = vmax.f32 %v134, 0.0
  %v174 = vmax.f32 %v136, 0.0
  %v175 = vmax.f32 %v139, 0.0
  %v176 = vmax.f32 %v141, 0.0
  %v177 = vmax.f32 %v144, 0.0
  %v178 = vmax.f32 %v146, 0.0
  %v179 = vmax.f32 %v149, 0.0
  %v180 = vmax.f32 %v151, 0.0
  %v181 = vmax.f32 %v154, 0.0
  %v182 = vmax.f32 %v156, 0.0
  %v183 = vmax.f32 %v159, 0.0
  %v184 = vmax.f32 %v161, 0.0
  %v185 = vmax.f32 %v164, 0.0
  %v186 = vmax.f32 %v166, 0.0
  %v187 = vmax.f32 %v169, 0.0
  %v188 = vmax.f32 %v171, 0.0
  %189 = vst [vmem:[%s3] sm:$0xff] %v173
  %190 = vst [vmem:[%s3 + $0x8] sm:$0xff] %v174
  %191 = vst [vmem:[%s3 + $0x10] sm:$0xff] %v175
  %192 = vst [vmem:[%s3 + $0x18] sm:$0xff] %v176
  %193 = vst [vmem:[%s3 + $0x20] sm:$0xff] %v177
  %194 = vst [vmem:[%s3 + $0x28] sm:$0xff] %v178
  %195 = vst [vmem:[%s3 + $0x30] sm:$0xff] %v179
  %196 = vst [vmem:[%s3 + $0x38] sm:$0xff] %v180
  %197 = vst [vmem:[%s3 + $0x40] sm:$0xff] %v181
  %198 = vst [vmem:[%s3 + $0x48] sm:$0xff] %v182
  %199 = vst [vmem:[%s3 + $0x50] sm:$0xff] %v183
  %200 = vst [vmem:[%s3 + $0x58] sm:$0xff] %v184
  %201 = vst [vmem:[%s3 + $0x60] sm:$0xff] %v185
  %202 = vst [vmem:[%s3 + $0x68] sm:$0xff] %v186
  %203 = vst [vmem:[%s3 + $0x70] sm:$0xff] %v187
  %204 = vst [vmem:[%s3 + $0x78] sm:$0xff] %v188
  // Predicated region
  $region14: #{backbone_with_fpn_forward.7} parent=0 // pred_check
    _
  $region15: #{backbone_with_fpn_forward.7} parent=0 // pred_check_branch
    %206 = sbr.rel (0) target = $region17
  $region16: #{backbone_with_fpn_forward.7} parent=0 // pred_region
    _
  $region17: #{backbone_with_fpn_forward.7} parent=0 // pred_fallthru
    _
  // Predicated region
  $region18: #{backbone_with_fpn_forward.7} parent=0 // pred_check
    _
  $region19: #{backbone_with_fpn_forward.7} parent=0 // pred_check_branch
    %208 = sbr.rel (0) target = $region21
  $region20: #{backbone_with_fpn_forward.7} parent=0 // pred_region
    _
  $region21: #{backbone_with_fpn_forward.7} parent=0 // pred_fallthru
    _

// kernel: backbone_with_fpn_forward.8
$region0: #{backbone_with_fpn_forward.8}
  #allocation0 [shape = 'u32[]', space=smem, size = 0x4, offset = 0x4, fixed_abs, tag = 'smem constant byte address 0x4 - core index']
  #allocation1 [shape = 'u32[72,128]{1,0:T(1,128)}', space=vmem, size = 0x9000, scoped, tag = 'internal scratch']
  %s0 = inlined_call_operand.vmem [shape: bf16[32,72], index: 0, kind: input, shape index: {}]
  %s1 = inlined_call_operand.vmem [shape: bf16[72,128], index: 1, kind: input, shape index: {}]
  %s2 = inlined_call_operand.vmem [shape: f32[1,128], index: 2, kind: input, shape index: {}]
  %s3 = inlined_call_operand.vmem [shape: f32[32,128], index: 3, kind: output, shape index: {}]
  %s4 = sld [smem:[#allocation0]]
  $region22: #{backbone_with_fpn_forward.8} parent=0
    _
  %s6 = ssub.s32 1, %s4
  %s7 = scalar_select 0, %s6, %s4
  // Predicated region
  $region2: #{backbone_with_fpn_forward.8} parent=0 // pred_check
    _
  $region3: #{backbone_with_fpn_forward.8} parent=0 // pred_check_branch
    %9 = sbr.rel (0) target = $region5
  $region4: #{backbone_with_fpn_forward.8} parent=0 // pred_region
    _
  $region5: #{backbone_with_fpn_forward.8} parent=0 // pred_fallthru
    _
  // Predicated region
  $region6: #{backbone_with_fpn_forward.8} parent=0 // pred_check
    _
  $region7: #{backbone_with_fpn_forward.8} parent=0 // pred_check_branch
    %11 = sbr.rel (0) target = $region9
  $region8: #{backbone_with_fpn_forward.8} parent=0 // pred_region
    _
  $region9: #{backbone_with_fpn_forward.8} parent=0 // pred_fallthru
    _
  // Predicated region
  $region10: #{backbone_with_fpn_forward.8} parent=0 // pred_check
    _
  $region11: #{backbone_with_fpn_forward.8} parent=0 // pred_check_branch
    %13 = sbr.rel (0) target = $region13
  $region12: #{backbone_with_fpn_forward.8} parent=0 // pred_region
    _
  $region13: #{backbone_with_fpn_forward.8} parent=0 // pred_fallthru
    _
  %v15 = vld [vmem:[%s0] sm:$0xf]
  %v16 = vld [vmem:[%s0 + $0x4] sm:$0xf]
  %v17 = vld [vmem:[%s0 + $0x8] sm:$0xf]
  %v18 = vld [vmem:[%s0 + $0xc] sm:$0xf]
  %v19 = vld [vmem:[%s1] sm:$0xf]
  %v20 = vld [vmem:[%s1 + $0x4] sm:$0xf]
  %v21 = vld [vmem:[%s1 + $0x8] sm:$0xf]
  %v22 = vld [vmem:[%s1 + $0xc] sm:$0xf]
  %v23 = vld [vmem:[%s1 + $0x10] sm:$0xf]
  %v24 = vld [vmem:[%s1 + $0x14] sm:$0xf]
  %v25 = vld [vmem:[%s1 + $0x18] sm:$0xf]
  %v26 = vld [vmem:[%s1 + $0x1c] sm:$0xf]
  %v27 = vld [vmem:[%s1 + $0x20] sm:$0xf]
  %v28 = vld [vmem:[%s2] sm:$0x1]
  %v30 = vperm.slane %v28, 0
  %v36 = vunpack.c.l.b16 %v15
  %v37 = vunpack.c.l.b16 %v16
  %v38 = vunpack.c.l.b16 %v17
  %v39 = vunpack.c.l.b16 %v18
  %v40 = vpack.c.b16 %v37, %v36
  %v41 = vpack.c.b16 %v39, %v38
  %v51 = vunpack.c.l.b16 %v19
  %v52 = vunpack.c.l.b16 %v20
  %v53 = vunpack.c.l.b16 %v21
  %v54 = vunpack.c.l.b16 %v22
  %v55 = vunpack.c.l.b16 %v23
  %v56 = vunpack.c.l.b16 %v24
  %v57 = vunpack.c.l.b16 %v25
  %v58 = vunpack.c.l.b16 %v26
  %v59 = vunpack.c.l.b16 %v27
  %v60 = vpack.c.b16 %v52, %v51
  %v61 = vpack.c.b16 %v54, %v53
  %v62 = vpack.c.b16 %v56, %v55
  %v63 = vpack.c.b16 %v58, %v57
  %v64 = vpack.c.b16 %v59, %v59
  %vm69 = vcmask 588800
  %v71 = vsel %vm69, %v40, 0
  %v74 = vsel %vm69, %v41, 0
  %vm76 = vcmask 1043456
  %v78 = vsel %vm76, %v64, 0
  %80 = vmatpush.bf16.msra.mxu0 0
  %81 = vmatpush.bf16.msra.mxu0 0
  %82 = vmatpush.bf16.msra.mxu0 0
  %83 = vmatpush.bf16.msra.mxu0 %v78
  %84 = vmatpush.bf16.msra.mxu0 %v63
  %85 = vmatpush.bf16.msra.mxu0 %v62
  %86 = vmatpush.bf16.msra.mxu0 %v61
  %87 = vmatpush.bf16.msra.mxu0 %v60
  %88 = vmatmul.bf16.gmra.mxu0 %v71
  %v89 = vpop.f32.mrf.mxu0
  %v90 = vadd.f32 %v30, %v89
  %v91 = vpop.f32.mrf.mxu0
  %v92 = vadd.f32 %v30, %v91
  %93 = vmatmul.bf16.gmra.mxu0 %v74
  %v94 = vpop.f32.mrf.mxu0
  %v95 = vadd.f32 %v30, %v94
  %v96 = vpop.f32.mrf.mxu0
  %v97 = vadd.f32 %v30, %v96
  %98 = vdwg.mxu0
  %v99 = vmax.f32 %v90, 0.0
  %v100 = vmax.f32 %v92, 0.0
  %v101 = vmax.f32 %v95, 0.0
  %v102 = vmax.f32 %v97, 0.0
  %103 = vst [vmem:[%s3] sm:$0xff] %v99
  %104 = vst [vmem:[%s3 + $0x8] sm:$0xff] %v100
  %105 = vst [vmem:[%s3 + $0x10] sm:$0xff] %v101
  %106 = vst [vmem:[%s3 + $0x18] sm:$0xff] %v102
  // Predicated region
  $region14: #{backbone_with_fpn_forward.8} parent=0 // pred_check
    _
  $region15: #{backbone_with_fpn_forward.8} parent=0 // pred_check_branch
    %108 = sbr.rel (0) target = $region17
  $region16: #{backbone_with_fpn_forward.8} parent=0 // pred_region
    _
  $region17: #{backbone_with_fpn_forward.8} parent=0 // pred_fallthru
    _
  // Predicated region
  $region18: #{backbone_with_fpn_forward.8} parent=0 // pred_check
    _
  $region19: #{backbone_with_fpn_forward.8} parent=0 // pred_check_branch
    %110 = sbr.rel (0) target = $region21
  $region20: #{backbone_with_fpn_forward.8} parent=0 // pred_region
    _
  $region21: #{backbone_with_fpn_forward.8} parent=0 // pred_fallthru
    _

// kernel: backbone_with_fpn_forward.10
$region0: #{backbone_with_fpn_forward.10}
  #allocation0 [shape = 'u32[]', space=smem, size = 0x4, offset = 0x4, fixed_abs, tag = 'smem constant byte address 0x4 - core index']
  #allocation1 [shape = 'u32[72,128]{1,0:T(1,128)}', space=vmem, size = 0x9000, scoped, tag = 'internal scratch']
  %s0 = inlined_call_operand.vmem [shape: bf16[8,32], index: 0, kind: input, shape index: {}]
  %s1 = inlined_call_operand.vmem [shape: bf16[32,128], index: 1, kind: input, shape index: {}]
  %s2 = inlined_call_operand.vmem [shape: f32[1,128], index: 2, kind: input, shape index: {}]
  %s3 = inlined_call_operand.vmem [shape: f32[8,128], index: 3, kind: output, shape index: {}]
  %s4 = sld [smem:[#allocation0]]
  $region22: #{backbone_with_fpn_forward.10} parent=0
    _
  %s6 = ssub.s32 1, %s4
  %s7 = scalar_select 0, %s6, %s4
  // Predicated region
  $region2: #{backbone_with_fpn_forward.10} parent=0 // pred_check
    _
  $region3: #{backbone_with_fpn_forward.10} parent=0 // pred_check_branch
    %9 = sbr.rel (0) target = $region5
  $region4: #{backbone_with_fpn_forward.10} parent=0 // pred_region
    _
  $region5: #{backbone_with_fpn_forward.10} parent=0 // pred_fallthru
    _
  // Predicated region
  $region6: #{backbone_with_fpn_forward.10} parent=0 // pred_check
    _
  $region7: #{backbone_with_fpn_forward.10} parent=0 // pred_check_branch
    %11 = sbr.rel (0) target = $region9
  $region8: #{backbone_with_fpn_forward.10} parent=0 // pred_region
    _
  $region9: #{backbone_with_fpn_forward.10} parent=0 // pred_fallthru
    _
  // Predicated region
  $region10: #{backbone_with_fpn_forward.10} parent=0 // pred_check
    _
  $region11: #{backbone_with_fpn_forward.10} parent=0 // pred_check_branch
    %13 = sbr.rel (0) target = $region13
  $region12: #{backbone_with_fpn_forward.10} parent=0 // pred_region
    _
  $region13: #{backbone_with_fpn_forward.10} parent=0 // pred_fallthru
    _
  %v15 = vld [vmem:[%s0] sm:$0xf]
  %v16 = vld [vmem:[%s1] sm:$0xf]
  %v17 = vld [vmem:[%s1 + $0x4] sm:$0xf]
  %v18 = vld [vmem:[%s1 + $0x8] sm:$0xf]
  %v19 = vld [vmem:[%s1 + $0xc] sm:$0xf]
  %v20 = vld [vmem:[%s2] sm:$0x1]
  %v22 = vperm.slane %v20, 0
  %v28 = vunpack.c.l.b16 %v16
  %v29 = vunpack.c.l.b16 %v17
  %v30 = vunpack.c.l.b16 %v18
  %v31 = vunpack.c.l.b16 %v19
  %v32 = vpack.c.b16 %v29, %v28
  %v33 = vpack.c.b16 %v31, %v30
  %vm36 = vcmask 261120
  %v38 = vsel %vm36, %v15, 0
  %40 = vmatpush.bf16.msra.mxu0 0
  %41 = vmatpush.bf16.msra.mxu0 0
  %42 = vmatpush.bf16.msra.mxu0 0
  %43 = vmatpush.bf16.msra.mxu0 0
  %44 = vmatpush.bf16.msra.mxu0 0
  %45 = vmatpush.bf16.msra.mxu0 0
  %46 = vmatpush.bf16.msra.mxu0 %v33
  %47 = vmatpush.bf16.msra.mxu0 %v32
  %48 = vmatmul.bf16.gmra.mxu0 %v38
  %v49 = vpop.f32.mrf.mxu0
  %v50 = vadd.f32 %v22, %v49
  %v51 = vpop.f32.mrf.mxu0
  %52 = vdwg.mxu0
  %53 = vst [vmem:[%s3] sm:$0xff] %v50
  // Predicated region
  $region14: #{backbone_with_fpn_forward.10} parent=0 // pred_check
    _
  $region15: #{backbone_with_fpn_forward.10} parent=0 // pred_check_branch
    %55 = sbr.rel (0) target = $region17
  $region16: #{backbone_with_fpn_forward.10} parent=0 // pred_region
    _
  $region17: #{backbone_with_fpn_forward.10} parent=0 // pred_fallthru
    _
  // Predicated region
  $region18: #{backbone_with_fpn_forward.10} parent=0 // pred_check
    _
  $region19: #{backbone_with_fpn_forward.10} parent=0 // pred_check_branch
    %57 = sbr.rel (0) target = $region21
  $region20: #{backbone_with_fpn_forward.10} parent=0 // pred_region
    _
  $region21: #{backbone_with_fpn_forward.10} parent=0 // pred_fallthru
    _

// kernel: backbone_with_fpn_forward.9
$region0: #{backbone_with_fpn_forward.9}
  #allocation0 [shape = 'u32[]', space=smem, size = 0x4, offset = 0x4, fixed_abs, tag = 'smem constant byte address 0x4 - core index']
  #allocation1 [shape = 'u32[72,128]{1,0:T(1,128)}', space=vmem, size = 0x9000, scoped, tag = 'internal scratch']
  %s0 = inlined_call_operand.vmem [shape: bf16[8,144], index: 0, kind: input, shape index: {}]
  %s1 = inlined_call_operand.vmem [shape: bf16[144,128], index: 1, kind: input, shape index: {}]
  %s2 = inlined_call_operand.vmem [shape: f32[1,128], index: 2, kind: input, shape index: {}]
  %s3 = inlined_call_operand.vmem [shape: f32[8,128], index: 3, kind: output, shape index: {}]
  %s4 = sld [smem:[#allocation0]]
  $region22: #{backbone_with_fpn_forward.9} parent=0
    _
  %s6 = ssub.s32 1, %s4
  %s7 = scalar_select 0, %s6, %s4
  // Predicated region
  $region2: #{backbone_with_fpn_forward.9} parent=0 // pred_check
    _
  $region3: #{backbone_with_fpn_forward.9} parent=0 // pred_check_branch
    %9 = sbr.rel (0) target = $region5
  $region4: #{backbone_with_fpn_forward.9} parent=0 // pred_region
    _
  $region5: #{backbone_with_fpn_forward.9} parent=0 // pred_fallthru
    _
  // Predicated region
  $region6: #{backbone_with_fpn_forward.9} parent=0 // pred_check
    _
  $region7: #{backbone_with_fpn_forward.9} parent=0 // pred_check_branch
    %11 = sbr.rel (0) target = $region9
  $region8: #{backbone_with_fpn_forward.9} parent=0 // pred_region
    _
  $region9: #{backbone_with_fpn_forward.9} parent=0 // pred_fallthru
    _
  // Predicated region
  $region10: #{backbone_with_fpn_forward.9} parent=0 // pred_check
    _
  $region11: #{backbone_with_fpn_forward.9} parent=0 // pred_check_branch
    %13 = sbr.rel (0) target = $region13
  $region12: #{backbone_with_fpn_forward.9} parent=0 // pred_region
    _
  $region13: #{backbone_with_fpn_forward.9} parent=0 // pred_fallthru
    _
  %v15 = vld [vmem:[%s0] sm:$0xff]
  %v16 = vld [vmem:[%s1] sm:$0xf]
  %v17 = vld [vmem:[%s1 + $0x4] sm:$0xf]
  %v18 = vld [vmem:[%s1 + $0x8] sm:$0xf]
  %v19 = vld [vmem:[%s1 + $0xc] sm:$0xf]
  %v20 = vld [vmem:[%s1 + $0x10] sm:$0xf]
  %v21 = vld [vmem:[%s1 + $0x14] sm:$0xf]
  %v22 = vld [vmem:[%s1 + $0x18] sm:$0xf]
  %v23 = vld [vmem:[%s1 + $0x1c] sm:$0xf]
  %v24 = vld [vmem:[%s1 + $0x20] sm:$0xf]
  %v25 = vld [vmem:[%s1 + $0x24] sm:$0xf]
  %v26 = vld [vmem:[%s1 + $0x28] sm:$0xf]
  %v27 = vld [vmem:[%s1 + $0x2c] sm:$0xf]
  %v28 = vld [vmem:[%s1 + $0x30] sm:$0xf]
  %v29 = vld [vmem:[%s1 + $0x34] sm:$0xf]
  %v30 = vld [vmem:[%s1 + $0x38] sm:$0xf]
  %v31 = vld [vmem:[%s1 + $0x3c] sm:$0xf]
  %v32 = vld [vmem:[%s1 + $0x40] sm:$0xf]
  %v33 = vld [vmem:[%s1 + $0x44] sm:$0xf]
  %v34 = vld [vmem:[%s2] sm:$0x1]
  %v36 = vperm.slane %v34, 0
  %v39 = vunpack.c.l.b16 %v15
  %v40 = vunpack.c.h.b16 %v15
  %v41 = vpack.c.b16 %v39, %v39
  %v42 = vpack.c.b16 %v40, %v40
  %v62 = vunpack.c.l.b16 %v16
  %v63 = vunpack.c.l.b16 %v17
  %v64 = vunpack.c.l.b16 %v18
  %v65 = vunpack.c.l.b16 %v19
  %v66 = vunpack.c.l.b16 %v20
  %v67 = vunpack.c.l.b16 %v21
  %v68 = vunpack.c.l.b16 %v22
  %v69 = vunpack.c.l.b16 %v23
  %v70 = vunpack.c.l.b16 %v24
  %v71 = vunpack.c.l.b16 %v25
  %v72 = vunpack.c.l.b16 %v26
  %v73 = vunpack.c.l.b16 %v27
  %v74 = vunpack.c.l.b16 %v28
  %v75 = vunpack.c.l.b16 %v29
  %v76 = vunpack.c.l.b16 %v30
  %v77 = vunpack.c.l.b16 %v31
  %v78 = vunpack.c.l.b16 %v32
  %v79 = vunpack.c.l.b16 %v33
  %v80 = vpack.c.b16 %v63, %v62
  %v81 = vpack.c.b16 %v65, %v64
  %v82 = vpack.c.b16 %v67, %v66
  %v83 = vpack.c.b16 %v69, %v68
  %v84 = vpack.c.b16 %v71, %v70
  %v85 = vpack.c.b16 %v73, %v72
  %v86 = vpack.c.b16 %v75, %v74
  %v87 = vpack.c.b16 %v77, %v76
  %v88 = vpack.c.b16 %v79, %v78
  %vm98 = vcmask 130048
  %v100 = vsel %vm98, %v42, 0
  %102 = vmatpush.bf16.msra.mxu0 %v87
  %103 = vmatpush.bf16.msra.mxu0 %v86
  %104 = vmatpush.bf16.msra.mxu0 %v85
  %105 = vmatpush.bf16.msra.mxu0 %v84
  %106 = vmatpush.bf16.msra.mxu0 %v83
  %107 = vmatpush.bf16.msra.mxu0 %v82
  %108 = vmatpush.bf16.msra.mxu0 %v81
  %109 = vmatpush.bf16.msra.mxu0 %v80
  %110 = vmatmul.bf16.gmra.mxu0 %v41
  %v111 = vpop.f32.mrf.mxu0
  %v112 = vadd.f32 %v36, %v111
  %v113 = vpop.f32.mrf.mxu0
  %114 = vdwg.mxu0
  %115 = vmatpush.bf16.msra.mxu0 0
  %116 = vmatpush.bf16.msra.mxu0 0
  %117 = vmatpush.bf16.msra.mxu0 0
  %118 = vmatpush.bf16.msra.mxu0 0
  %119 = vmatpush.bf16.msra.mxu0 0
  %120 = vmatpush.bf16.msra.mxu0 0
  %121 = vmatpush.bf16.msra.mxu0 0
  %122 = vmatpush.bf16.msra.mxu0 %v88
  %123 = vmatmul.bf16.gmra.mxu0 %v100
  %v124 = vpop.f32.mrf.mxu0
  %v125 = vadd.f32 %v112, %v124
  %v126 = vpop.f32.mrf.mxu0
  %127 = vdwg.mxu0
  %v128 = vmax.f32 %v125, 0.0
  %129 = vst [vmem:[%s3] sm:$0xff] %v128
  // Predicated region
  $region14: #{backbone_with_fpn_forward.9} parent=0 // pred_check
    _
  $region15: #{backbone_with_fpn_forward.9} parent=0 // pred_check_branch
    %131 = sbr.rel (0) target = $region17
  $region16: #{backbone_with_fpn_forward.9} parent=0 // pred_region
    _
  $region17: #{backbone_with_fpn_forward.9} parent=0 // pred_fallthru
    _
  // Predicated region
  $region18: #{backbone_with_fpn_forward.9} parent=0 // pred_check
    _
  $region19: #{backbone_with_fpn_forward.9} parent=0 // pred_check_branch
    %133 = sbr.rel (0) target = $region21
  $region20: #{backbone_with_fpn_forward.9} parent=0 // pred_region
    _
  $region21: #{backbone_with_fpn_forward.9} parent=0 // pred_fallthru
    _

// kernel: backbone_with_fpn_forward.11
$region0: #{backbone_with_fpn_forward.11}
  #allocation0 [shape = 'u32[]', space=smem, size = 0x4, offset = 0x4, fixed_abs, tag = 'smem constant byte address 0x4 - core index']
  #allocation1 [shape = 'u32[72,128]{1,0:T(1,128)}', space=vmem, size = 0x9000, scoped, tag = 'internal scratch']
  %s0 = inlined_call_operand.vmem [shape: bf16[32,16], index: 0, kind: input, shape index: {}]
  %s1 = inlined_call_operand.vmem [shape: bf16[16,128], index: 1, kind: input, shape index: {}]
  %s2 = inlined_call_operand.vmem [shape: f32[1,128], index: 2, kind: input, shape index: {}]
  %s3 = inlined_call_operand.vmem [shape: f32[32,128], index: 3, kind: input, shape index: {}]
  %s4 = inlined_call_operand.vmem [shape: f32[32,128], index: 4, kind: output, shape index: {}]
  %s5 = sld [smem:[#allocation0]]
  $region26: #{backbone_with_fpn_forward.11} parent=0
    _
  %s7 = ssub.s32 1, %s5
  %s8 = scalar_select 0, %s7, %s5
  // Predicated region
  $region2: #{backbone_with_fpn_forward.11} parent=0 // pred_check
    _
  $region3: #{backbone_with_fpn_forward.11} parent=0 // pred_check_branch
    %10 = sbr.rel (0) target = $region5
  $region4: #{backbone_with_fpn_forward.11} parent=0 // pred_region
    _
  $region5: #{backbone_with_fpn_forward.11} parent=0 // pred_fallthru
    _
  // Predicated region
  $region6: #{backbone_with_fpn_forward.11} parent=0 // pred_check
    _
  $region7: #{backbone_with_fpn_forward.11} parent=0 // pred_check_branch
    %12 = sbr.rel (0) target = $region9
  $region8: #{backbone_with_fpn_forward.11} parent=0 // pred_region
    _
  $region9: #{backbone_with_fpn_forward.11} parent=0 // pred_fallthru
    _
  // Predicated region
  $region10: #{backbone_with_fpn_forward.11} parent=0 // pred_check
    _
  $region11: #{backbone_with_fpn_forward.11} parent=0 // pred_check_branch
    %14 = sbr.rel (0) target = $region13
  $region12: #{backbone_with_fpn_forward.11} parent=0 // pred_region
    _
  $region13: #{backbone_with_fpn_forward.11} parent=0 // pred_fallthru
    _
  // Predicated region
  $region14: #{backbone_with_fpn_forward.11} parent=0 // pred_check
    _
  $region15: #{backbone_with_fpn_forward.11} parent=0 // pred_check_branch
    %16 = sbr.rel (0) target = $region17
  $region16: #{backbone_with_fpn_forward.11} parent=0 // pred_region
    _
  $region17: #{backbone_with_fpn_forward.11} parent=0 // pred_fallthru
    _
  %v18 = vld [vmem:[%s0] sm:$0xf]
  %v19 = vld [vmem:[%s0 + $0x4] sm:$0xf]
  %v20 = vld [vmem:[%s0 + $0x8] sm:$0xf]
  %v21 = vld [vmem:[%s0 + $0xc] sm:$0xf]
  %v22 = vld [vmem:[%s1] sm:$0xf]
  %v23 = vld [vmem:[%s1 + $0x4] sm:$0xf]
  %v24 = vld [vmem:[%s2] sm:$0x1]
  %v26 = vperm.slane %v24, 0
  %v32 = vunpack.c.l.b16 %v18
  %v33 = vunpack.c.l.b16 %v19
  %v34 = vunpack.c.l.b16 %v20
  %v35 = vunpack.c.l.b16 %v21
  %v36 = vpack.c.b16 %v33, %v32
  %v37 = vpack.c.b16 %v35, %v34
  %v40 = vunpack.c.l.b16 %v22
  %v41 = vunpack.c.l.b16 %v23
  %v42 = vpack.c.b16 %v41, %v40
  %vm44 = vcmask 130048
  %v46 = vsel %vm44, %v36, 0
  %v49 = vsel %vm44, %v37, 0
  %51 = vmatpush.bf16.msra.mxu0 0
  %52 = vmatpush.bf16.msra.mxu0 0
  %53 = vmatpush.bf16.msra.mxu0 0
  %54 = vmatpush.bf16.msra.mxu0 0
  %55 = vmatpush.bf16.msra.mxu0 0
  %56 = vmatpush.bf16.msra.mxu0 0
  %57 = vmatpush.bf16.msra.mxu0 0
  %58 = vmatpush.bf16.msra.mxu0 %v42
  %59 = vmatmul.bf16.gmra.mxu0 %v46
  %v60 = vpop.f32.mrf.mxu0
  %v61 = vadd.f32 %v26, %v60
  %v62 = vpop.f32.mrf.mxu0
  %v63 = vadd.f32 %v26, %v62
  %64 = vmatmul.bf16.gmra.mxu0 %v49
  %v65 = vpop.f32.mrf.mxu0
  %v66 = vadd.f32 %v26, %v65
  %v67 = vpop.f32.mrf.mxu0
  %v68 = vadd.f32 %v26, %v67
  %69 = vdwg.mxu0
  %v70 = vld [vmem:[%s3] sm:$0xff]
  %v71 = vld [vmem:[%s3 + $0x8] sm:$0xff]
  %v72 = vld [vmem:[%s3 + $0x10] sm:$0xff]
  %v73 = vld [vmem:[%s3 + $0x18] sm:$0xff]
  %v74 = vadd.f32 %v61, %v70
  %v75 = vadd.f32 %v63, %v71
  %v76 = vadd.f32 %v66, %v72
  %v77 = vadd.f32 %v68, %v73
  %78 = vst [vmem:[%s4] sm:$0xff] %v74
  %79 = vst [vmem:[%s4 + $0x8] sm:$0xff] %v75
  %80 = vst [vmem:[%s4 + $0x10] sm:$0xff] %v76
  %81 = vst [vmem:[%s4 + $0x18] sm:$0xff] %v77
  // Predicated region
  $region18: #{backbone_with_fpn_forward.11} parent=0 // pred_check
    _
  $region19: #{backbone_with_fpn_forward.11} parent=0 // pred_check_branch
    %83 = sbr.rel (0) target = $region21
  $region20: #{backbone_with_fpn_forward.11} parent=0 // pred_region
    _
  $region21: #{backbone_with_fpn_forward.11} parent=0 // pred_fallthru
    _
  // Predicated region
  $region22: #{backbone_with_fpn_forward.11} parent=0 // pred_check
    _
  $region23: #{backbone_with_fpn_forward.11} parent=0 // pred_check_branch
    %85 = sbr.rel (0) target = $region25
  $region24: #{backbone_with_fpn_forward.11} parent=0 // pred_region
    _
  $region25: #{backbone_with_fpn_forward.11} parent=0 // pred_fallthru
    _

// kernel: backbone_with_fpn_forward.12
$region0: #{backbone_with_fpn_forward.12}
  #allocation0 [shape = 'u32[]', space=smem, size = 0x4, offset = 0x4, fixed_abs, tag = 'smem constant byte address 0x4 - core index']
  #allocation1 [shape = 'u32[72,128]{1,0:T(1,128)}', space=vmem, size = 0x9000, scoped, tag = 'internal scratch']
  %s0 = inlined_call_operand.vmem [shape: bf16[128,8], index: 0, kind: input, shape index: {}]
  %s1 = inlined_call_operand.vmem [shape: bf16[8,128], index: 1, kind: input, shape index: {}]
  %s2 = inlined_call_operand.vmem [shape: f32[1,128], index: 2, kind: input, shape index: {}]
  %s3 = inlined_call_operand.vmem [shape: f32[128,128], index: 3, kind: input, shape index: {}]
  %s4 = inlined_call_operand.vmem [shape: f32[128,128], index: 4, kind: output, shape index: {}]
  %s5 = sld [smem:[#allocation0]]
  $region26: #{backbone_with_fpn_forward.12} parent=0
    _
  %s7 = ssub.s32 1, %s5
  %s8 = scalar_select 0, %s7, %s5
  // Predicated region
  $region2: #{backbone_with_fpn_forward.12} parent=0 // pred_check
    _
  $region3: #{backbone_with_fpn_forward.12} parent=0 // pred_check_branch
    %10 = sbr.rel (0) target = $region5
  $region4: #{backbone_with_fpn_forward.12} parent=0 // pred_region
    _
  $region5: #{backbone_with_fpn_forward.12} parent=0 // pred_fallthru
    _
  // Predicated region
  $region6: #{backbone_with_fpn_forward.12} parent=0 // pred_check
    _
  $region7: #{backbone_with_fpn_forward.12} parent=0 // pred_check_branch
    %12 = sbr.rel (0) target = $region9
  $region8: #{backbone_with_fpn_forward.12} parent=0 // pred_region
    _
  $region9: #{backbone_with_fpn_forward.12} parent=0 // pred_fallthru
    _
  // Predicated region
  $region10: #{backbone_with_fpn_forward.12} parent=0 // pred_check
    _
  $region11: #{backbone_with_fpn_forward.12} parent=0 // pred_check_branch
    %14 = sbr.rel (0) target = $region13
  $region12: #{backbone_with_fpn_forward.12} parent=0 // pred_region
    _
  $region13: #{backbone_with_fpn_forward.12} parent=0 // pred_fallthru
    _
  // Predicated region
  $region14: #{backbone_with_fpn_forward.12} parent=0 // pred_check
    _
  $region15: #{backbone_with_fpn_forward.12} parent=0 // pred_check_branch
    %16 = sbr.rel (0) target = $region17
  $region16: #{backbone_with_fpn_forward.12} parent=0 // pred_region
    _
  $region17: #{backbone_with_fpn_forward.12} parent=0 // pred_fallthru
    _
  %v18 = vld [vmem:[%s0] sm:$0xf]
  %v19 = vld [vmem:[%s0 + $0x4] sm:$0xf]
  %v20 = vld [vmem:[%s0 + $0x8] sm:$0xf]
  %v21 = vld [vmem:[%s0 + $0xc] sm:$0xf]
  %v22 = vld [vmem:[%s0 + $0x10] sm:$0xf]
  %v23 = vld [vmem:[%s0 + $0x14] sm:$0xf]
  %v24 = vld [vmem:[%s0 + $0x18] sm:$0xf]
  %v25 = vld [vmem:[%s0 + $0x1c] sm:$0xf]
  %v26 = vld [vmem:[%s0 + $0x20] sm:$0xf]
  %v27 = vld [vmem:[%s0 + $0x24] sm:$0xf]
  %v28 = vld [vmem:[%s0 + $0x28] sm:$0xf]
  %v29 = vld [vmem:[%s0 + $0x2c] sm:$0xf]
  %v30 = vld [vmem:[%s0 + $0x30] sm:$0xf]
  %v31 = vld [vmem:[%s0 + $0x34] sm:$0xf]
  %v32 = vld [vmem:[%s0 + $0x38] sm:$0xf]
  %v33 = vld [vmem:[%s0 + $0x3c] sm:$0xf]
  %v34 = vld [vmem:[%s1] sm:$0xf]
  %v35 = vld [vmem:[%s2] sm:$0x1]
  %v37 = vperm.slane %v35, 0
  %v55 = vunpack.c.l.b16 %v18
  %v56 = vunpack.c.l.b16 %v19
  %v57 = vunpack.c.l.b16 %v20
  %v58 = vunpack.c.l.b16 %v21
  %v59 = vunpack.c.l.b16 %v22
  %v60 = vunpack.c.l.b16 %v23
  %v61 = vunpack.c.l.b16 %v24
  %v62 = vunpack.c.l.b16 %v25
  %v63 = vunpack.c.l.b16 %v26
  %v64 = vunpack.c.l.b16 %v27
  %v65 = vunpack.c.l.b16 %v28
  %v66 = vunpack.c.l.b16 %v29
  %v67 = vunpack.c.l.b16 %v30
  %v68 = vunpack.c.l.b16 %v31
  %v69 = vunpack.c.l.b16 %v32
  %v70 = vunpack.c.l.b16 %v33
  %v71 = vpack.c.b16 %v56, %v55
  %v72 = vpack.c.b16 %v58, %v57
  %v73 = vpack.c.b16 %v60, %v59
  %v74 = vpack.c.b16 %v62, %v61
  %v75 = vpack.c.b16 %v64, %v63
  %v76 = vpack.c.b16 %v66, %v65
  %v77 = vpack.c.b16 %v68, %v67
  %v78 = vpack.c.b16 %v70, %v69
  %vm79 = vcmask 64512
  %v81 = vsel %vm79, %v71, 0
  %v84 = vsel %vm79, %v72, 0
  %v87 = vsel %vm79, %v73, 0
  %v90 = vsel %vm79, %v74, 0
  %v93 = vsel %vm79, %v75, 0
  %v96 = vsel %vm79, %v76, 0
  %v99 = vsel %vm79, %v77, 0
  %v102 = vsel %vm79, %v78, 0
  %vm104 = vcmask 1043456
  %v106 = vsel %vm104, %v34, 0
  %108 = vmatpush.bf16.msra.mxu0 0
  %109 = vmatpush.bf16.msra.mxu0 0
  %110 = vmatpush.bf16.msra.mxu0 0
  %111 = vmatpush.bf16.msra.mxu0 0
  %112 = vmatpush.bf16.msra.mxu0 0
  %113 = vmatpush.bf16.msra.mxu0 0
  %114 = vmatpush.bf16.msra.mxu0 0
  %115 = vmatpush.bf16.msra.mxu0 %v106
  %116 = vmatmul.bf16.gmra.mxu0 %v81
  %v117 = vpop.f32.mrf.mxu0
  %v118 = vadd.f32 %v37, %v117
  %v119 = vpop.f32.mrf.mxu0
  %v120 = vadd.f32 %v37, %v119
  %121 = vmatmul.bf16.gmra.mxu0 %v84
  %v122 = vpop.f32.mrf.mxu0
  %v123 = vadd.f32 %v37, %v122
  %v124 = vpop.f32.mrf.mxu0
  %v125 = vadd.f32 %v37, %v124
  %126 = vmatmul.bf16.gmra.mxu0 %v87
  %v127 = vpop.f32.mrf.mxu0
  %v128 = vadd.f32 %v37, %v127
  %v129 = vpop.f32.mrf.mxu0
  %v130 = vadd.f32 %v37, %v129
  %131 = vmatmul.bf16.gmra.mxu0 %v90
  %v132 = vpop.f32.mrf.mxu0
  %v133 = vadd.f32 %v37, %v132
  %v134 = vpop.f32.mrf.mxu0
  %v135 = vadd.f32 %v37, %v134
  %136 = vmatmul.bf16.gmra.mxu0 %v93
  %v137 = vpop.f32.mrf.mxu0
  %v138 = vadd.f32 %v37, %v137
  %v139 = vpop.f32.mrf.mxu0
  %v140 = vadd.f32 %v37, %v139
  %141 = vmatmul.bf16.gmra.mxu0 %v96
  %v142 = vpop.f32.mrf.mxu0
  %v143 = vadd.f32 %v37, %v142
  %v144 = vpop.f32.mrf.mxu0
  %v145 = vadd.f32 %v37, %v144
  %146 = vmatmul.bf16.gmra.mxu0 %v99
  %v147 = vpop.f32.mrf.mxu0
  %v148 = vadd.f32 %v37, %v147
  %v149 = vpop.f32.mrf.mxu0
  %v150 = vadd.f32 %v37, %v149
  %151 = vmatmul.bf16.gmra.mxu0 %v102
  %v152 = vpop.f32.mrf.mxu0
  %v153 = vadd.f32 %v37, %v152
  %v154 = vpop.f32.mrf.mxu0
  %v155 = vadd.f32 %v37, %v154
  %156 = vdwg.mxu0
  %v157 = vld [vmem:[%s3] sm:$0xff]
  %v158 = vld [vmem:[%s3 + $0x8] sm:$0xff]
  %v159 = vld [vmem:[%s3 + $0x10] sm:$0xff]
  %v160 = vld [vmem:[%s3 + $0x18] sm:$0xff]
  %v161 = vld [vmem:[%s3 + $0x20] sm:$0xff]
  %v162 = vld [vmem:[%s3 + $0x28] sm:$0xff]
  %v163 = vld [vmem:[%s3 + $0x30] sm:$0xff]
  %v164 = vld [vmem:[%s3 + $0x38] sm:$0xff]
  %v165 = vld [vmem:[%s3 + $0x40] sm:$0xff]
  %v166 = vld [vmem:[%s3 + $0x48] sm:$0xff]
  %v167 = vld [vmem:[%s3 + $0x50] sm:$0xff]
  %v168 = vld [vmem:[%s3 + $0x58] sm:$0xff]
  %v169 = vld [vmem:[%s3 + $0x60] sm:$0xff]
  %v170 = vld [vmem:[%s3 + $0x68] sm:$0xff]
  %v171 = vld [vmem:[%s3 + $0x70] sm:$0xff]
  %v172 = vld [vmem:[%s3 + $0x78] sm:$0xff]
  %v173 = vadd.f32 %v118, %v157
  %v174 = vadd.f32 %v120, %v158
  %v175 = vadd.f32 %v123, %v159
  %v176 = vadd.f32 %v125, %v160
  %v177 = vadd.f32 %v128, %v161
  %v178 = vadd.f32 %v130, %v162
  %v179 = vadd.f32 %v133, %v163
  %v180 = vadd.f32 %v135, %v164
  %v181 = vadd.f32 %v138, %v165
  %v182 = vadd.f32 %v140, %v166
  %v183 = vadd.f32 %v143, %v167
  %v184 = vadd.f32 %v145, %v168
  %v185 = vadd.f32 %v148, %v169
  %v186 = vadd.f32 %v150, %v170
  %v187 = vadd.f32 %v153, %v171
  %v188 = vadd.f32 %v155, %v172
  %189 = vst [vmem:[%s4] sm:$0xff] %v173
  %190 = vst [vmem:[%s4 + $0x8] sm:$0xff] %v174
  %191 = vst [vmem:[%s4 + $0x10] sm:$0xff] %v175
  %192 = vst [vmem:[%s4 + $0x18] sm:$0xff] %v176
  %193 = vst [vmem:[%s4 + $0x20] sm:$0xff] %v177
  %194 = vst [vmem:[%s4 + $0x28] sm:$0xff] %v178
  %195 = vst [vmem:[%s4 + $0x30] sm:$0xff] %v179
  %196 = vst [vmem:[%s4 + $0x38] sm:$0xff] %v180
  %197 = vst [vmem:[%s4 + $0x40] sm:$0xff] %v181
  %198 = vst [vmem:[%s4 + $0x48] sm:$0xff] %v182
  %199 = vst [vmem:[%s4 + $0x50] sm:$0xff] %v183
  %200 = vst [vmem:[%s4 + $0x58] sm:$0xff] %v184
  %201 = vst [vmem:[%s4 + $0x60] sm:$0xff] %v185
  %202 = vst [vmem:[%s4 + $0x68] sm:$0xff] %v186
  %203 = vst [vmem:[%s4 + $0x70] sm:$0xff] %v187
  %204 = vst [vmem:[%s4 + $0x78] sm:$0xff] %v188
  // Predicated region
  $region18: #{backbone_with_fpn_forward.12} parent=0 // pred_check
    _
  $region19: #{backbone_with_fpn_forward.12} parent=0 // pred_check_branch
    %206 = sbr.rel (0) target = $region21
  $region20: #{backbone_with_fpn_forward.12} parent=0 // pred_region
    _
  $region21: #{backbone_with_fpn_forward.12} parent=0 // pred_fallthru
    _
  // Predicated region
  $region22: #{backbone_with_fpn_forward.12} parent=0 // pred_check
    _
  $region23: #{backbone_with_fpn_forward.12} parent=0 // pred_check_branch
    %208 = sbr.rel (0) target = $region25
  $region24: #{backbone_with_fpn_forward.12} parent=0 // pred_region
    _
  $region25: #{backbone_with_fpn_forward.12} parent=0 // pred_fallthru
    _

// kernel: backbone_with_fpn_forward.13
$region0: #{backbone_with_fpn_forward.13}
  #allocation0 [shape = 'u32[]', space=smem, size = 0x4, offset = 0x4, fixed_abs, tag = 'smem constant byte address 0x4 - core index']
  #allocation1 [shape = 'u32[72,128]{1,0:T(1,128)}', space=vmem, size = 0x9000, scoped, tag = 'internal scratch']
  %s0 = inlined_call_operand.vmem [shape: bf16[3,128,144], index: 0, kind: input, shape index: {}]
  %s1 = inlined_call_operand.vmem [shape: bf16[3,144,128], index: 1, kind: input, shape index: {}]
  %s2 = inlined_call_operand.vmem [shape: f32[3,1,128], index: 2, kind: input, shape index: {}]
  %s3 = inlined_call_operand.vmem [shape: f32[3,128,128], index: 3, kind: output, shape index: {}]
  %s4 = sld [smem:[#allocation0]]
  $region45: #{backbone_with_fpn_forward.13} parent=0
    _
  %s6 = ssub.s32 1, %s4
  %s7 = scalar_select 0, %s6, %s4
  loop: start=0, step=1, limit=5
  $region2: #{backbone_with_fpn_forward.13} parent=0 // loop_pre_header
    _
  $region3: #{backbone_with_fpn_forward.13} parent=0 // loop_header
    %s9 = sphi 0, %s13
    %p10 = scmp.ge.s32.totalorder %s9, 5
    %s19 = sphi 0, %s21
    %s22 = sphi 0, %s19
    %s23 = sphi 0, %s22
    %s39 = sphi 0, %s23
    %s45 = sphi 0, %s47
    %s48 = sphi 0, %s45
    %s49 = sphi 0, %s48
    %s65 = sphi 0, %s49
    %s71 = sphi 0, %s73
    %s74 = sphi 0, %s71
    %s75 = sphi 0, %s74
    %s91 = sphi 0, %s75
    %s97 = sphi 0, %s99
    %s100 = sphi 0, %s97
    %s101 = sphi 0, %s100
    %s117 = sphi 0, %s101
  $region4: #{backbone_with_fpn_forward.13} parent=0 // loop_header_branch
    %12 = sbr.rel (%p10) target = $region8
  $region5: #{backbone_with_fpn_forward.13} parent=0 // loop_body
    %s14 = ssub.s32 %s9, 1
    %s15 = ssub.s32 %s9, 2
    %s16 = sadd.s32 %s9, 1
    %s17 = ssub.s32 %s9, %s16
    %p18 = scmp.eq.s32.totalorder %s17, 0
    %s20 = sadd.s32 %s19, 1
    %s21 = scalar_select %p18, %s19, %s20
    %p24 = pneg %p18
    %p25 = scmp.eq.s32.totalorder %s9, 2
    %p26 = por %p24, %p25
    %p27 = scmp.ne.s32.totalorder %s19, %s22
    %p28 = scmp.eq.s32.totalorder %s9, 0
    %p29 = por %p27, %p28
    %p30 = scmp.ne.s32.totalorder %s19, %s22
    %p31 = scmp.eq.s32.totalorder %s14, 2
    %p32 = por %p30, %p31
    %p33 = scmp.ne.s32.totalorder %s22, %s23
    %p34 = scmp.eq.s32.totalorder %s14, 0
    %p35 = por %p33, %p34
    %p36 = scmp.ne.s32.totalorder %s22, %s23
    %p37 = scmp.eq.s32.totalorder %s15, 2
    %p38 = por %p36, %p37
    %p40 = scmp.ne.s32.totalorder %s23, %s39
    %p41 = scmp.eq.s32.totalorder %s15, 0
    %p42 = por %p40, %p41
    %s43 = ssub.s32 %s9, %s16
    %p44 = scmp.eq.s32.totalorder %s43, 0
    %s46 = sadd.s32 %s45, 1
    %s47 = scalar_select %p44, %s45, %s46
    %p50 = pneg %p44
    %p51 = scmp.eq.s32.totalorder %s9, 2
    %p52 = por %p50, %p51
    %p53 = scmp.ne.s32.totalorder %s45, %s48
    %p54 = scmp.eq.s32.totalorder %s9, 0
    %p55 = por %p53, %p54
    %p56 = scmp.ne.s32.totalorder %s45, %s48
    %p57 = scmp.eq.s32.totalorder %s14, 2
    %p58 = por %p56, %p57
    %p59 = scmp.ne.s32.totalorder %s48, %s49
    %p60 = scmp.eq.s32.totalorder %s14, 0
    %p61 = por %p59, %p60
    %p62 = scmp.ne.s32.totalorder %s48, %s49
    %p63 = scmp.eq.s32.totalorder %s15, 2
    %p64 = por %p62, %p63
    %p66 = scmp.ne.s32.totalorder %s49, %s65
    %p67 = scmp.eq.s32.totalorder %s15, 0
    %p68 = por %p66, %p67
    %s69 = ssub.s32 %s9, %s16
    %p70 = scmp.eq.s32.totalorder %s69, 0
    %s72 = sadd.s32 %s71, 1
    %s73 = scalar_select %p70, %s71, %s72
    %p76 = pneg %p70
    %p77 = scmp.eq.s32.totalorder %s9, 2
    %p78 = por %p76, %p77
    %p79 = scmp.ne.s32.totalorder %s71, %s74
    %p80 = scmp.eq.s32.totalorder %s9, 0
    %p81 = por %p79, %p80
    %p82 = scmp.ne.s32.totalorder %s71, %s74
    %p83 = scmp.eq.s32.totalorder %s14, 2
    %p84 = por %p82, %p83
    %p85 = scmp.ne.s32.totalorder %s74, %s75
    %p86 = scmp.eq.s32.totalorder %s14, 0
    %p87 = por %p85, %p86
    %p88 = scmp.ne.s32.totalorder %s74, %s75
    %p89 = scmp.eq.s32.totalorder %s15, 2
    %p90 = por %p88, %p89
    %p92 = scmp.ne.s32.totalorder %s75, %s91
    %p93 = scmp.eq.s32.totalorder %s15, 0
    %p94 = por %p92, %p93
    %s95 = ssub.s32 %s9, %s16
    %p96 = scmp.eq.s32.totalorder %s95, 0
    %s98 = sadd.s32 %s97, 1
    %s99 = scalar_select %p96, %s97, %s98
    %p102 = pneg %p96
    %p103 = scmp.eq.s32.totalorder %s9, 2
    %p104 = por %p102, %p103
    %p105 = scmp.ne.s32.totalorder %s97, %s100
    %p106 = scmp.eq.s32.totalorder %s9, 0
    %p107 = por %p105, %p106
    %p108 = scmp.ne.s32.totalorder %s97, %s100
    %p109 = scmp.eq.s32.totalorder %s14, 2
    %p110 = por %p108, %p109
    %p111 = scmp.ne.s32.totalorder %s100, %s101
    %p112 = scmp.eq.s32.totalorder %s14, 0
    %p113 = por %p111, %p112
    %p114 = scmp.ne.s32.totalorder %s100, %s101
    %p115 = scmp.eq.s32.totalorder %s15, 2
    %p116 = por %p114, %p115
    %p118 = scmp.ne.s32.totalorder %s101, %s117
    %p119 = scmp.eq.s32.totalorder %s15, 0
    %p120 = por %p118, %p119
    %p121 = scmp.le.s32.totalorder 1, %s9
    %p122 = scmp.lt.s32.totalorder %s9, 4
    %p123 = pnand %p121, %p122
    %p124 = pneg %p123
    // Predicated region
    $region9: #{backbone_with_fpn_forward.13} parent=5 // pred_check
      _
    $region10: #{backbone_with_fpn_forward.13} parent=5 // pred_check_branch
      %126 = sbr.rel (%p123) target = $region12
    $region11: #{backbone_with_fpn_forward.13} parent=5 // pred_region
      %s127 = ssub.s32 %s9, 1
    $region12: #{backbone_with_fpn_forward.13} parent=5 // pred_fallthru
      _
    %p128 = scmp.lt.s32.totalorder %s9, 3
    // Predicated region
    $region13: #{backbone_with_fpn_forward.13} parent=5 // pred_check
      %p129 = pneg %p128
    $region14: #{backbone_with_fpn_forward.13} parent=5 // pred_check_branch
      %131 = sbr.rel (%p129) target = $region16
    $region15: #{backbone_with_fpn_forward.13} parent=5 // pred_region
      // Predicated region
      $region17: #{backbone_with_fpn_forward.13} parent=15 // pred_check
        %p132 = pneg %p29
      $region18: #{backbone_with_fpn_forward.13} parent=15 // pred_check_branch
        %134 = sbr.rel (%p132) target = $region20
      $region19: #{backbone_with_fpn_forward.13} parent=15 // pred_region
        %p135 = scmp.lt.s32.totalorder %s9, 2
        %s136 = scalar_select %p135, %s9, 2
        %s137 = smul.addr %s136, 32
        %s138 = smul.addr %s137, 4
        %s139 = scalar_lea.vmem %s0, %s138
      $region20: #{backbone_with_fpn_forward.13} parent=15 // pred_fallthru
        _
      // Predicated region
      $region21: #{backbone_with_fpn_forward.13} parent=15 // pred_check
        %p140 = pneg %p55
      $region22: #{backbone_with_fpn_forward.13} parent=15 // pred_check_branch
        %142 = sbr.rel (%p140) target = $region24
      $region23: #{backbone_with_fpn_forward.13} parent=15 // pred_region
        %p143 = scmp.lt.s32.totalorder %s9, 2
        %s144 = scalar_select %p143, %s9, 2
        %s145 = smul.addr %s144, 18
        %s146 = smul.addr %s145, 4
        %s147 = scalar_lea.vmem %s1, %s146
      $region24: #{backbone_with_fpn_forward.13} parent=15 // pred_fallthru
        _
      // Predicated region
      $region25: #{backbone_with_fpn_forward.13} parent=15 // pred_check
        %p148 = pneg %p81
      $region26: #{backbone_with_fpn_forward.13} parent=15 // pred_check_branch
        %150 = sbr.rel (%p148) target = $region28
      $region27: #{backbone_with_fpn_forward.13} parent=15 // pred_region
        %p151 = scmp.lt.s32.totalorder %s9, 2
        %s152 = scalar_select %p151, %s9, 2
        %s153 = scalar_lea.vmem %s2, %s152
      $region28: #{backbone_with_fpn_forward.13} parent=15 // pred_fallthru
        _
    $region16: #{backbone_with_fpn_forward.13} parent=5 // pred_fallthru
      _
    %p154 = scmp.le.s32.totalorder 1, %s9
    %p155 = scmp.lt.s32.totalorder %s9, 4
    %p156 = pnand %p154, %p155
    %p157 = pneg %p156
    // Predicated region
    $region29: #{backbone_with_fpn_forward.13} parent=5 // pred_check
      _
    $region30: #{backbone_with_fpn_forward.13} parent=5 // pred_check_branch
      %159 = sbr.rel (%p156) target = $region32
    $region31: #{backbone_with_fpn_forward.13} parent=5 // pred_region
      %s160 = ssub.s32 %s9, 1
      %p161 = scmp.lt.s32.totalorder %s14, 2
      %s162 = scalar_select %p161, %s14, 2
      %s163 = smul.addr %s162, 32
      %s164 = smul.addr %s163, 4
      %s165 = scalar_lea.vmem %s0, %s164
      %p166 = pneg %p35
      %p167 = pneg %p32
      %p168 = scmp.lt.s32.totalorder %s14, 2
      %s169 = scalar_select %p168, %s14, 2
      %s170 = smul.addr %s169, 18
      %s171 = smul.addr %s170, 4
      %s172 = scalar_lea.vmem %s1, %s171
      %p173 = pneg %p61
      %p174 = pneg %p58
      %p175 = scmp.lt.s32.totalorder %s14, 2
      %s176 = scalar_select %p175, %s14, 2
      %s177 = scalar_lea.vmem %s2, %s176
      %p178 = pneg %p87
      %p179 = pneg %p84
      %p180 = pneg %p113
      %p181 = pneg %p110
      %p182 = scmp.lt.s32.totalorder %s14, 2
      %s183 = scalar_select %p182, %s14, 2
      %s184 = smul.addr %s183, 16
      %s185 = smul.addr %s184, 8
      %s186 = scalar_lea.vmem %s3, %s185
      %p187 = scmp.lt.s32.totalorder %s14, 2
      %s188 = scalar_select %p187, %s14, 2
      %s189 = smul.addr %s188, 32
      %s190 = smul.addr %s189, 4
      %s191 = scalar_lea.vmem %s0, %s190
      %p192 = scmp.lt.s32.totalorder %s14, 2
      %s193 = scalar_select %p192, %s14, 2
      %s194 = smul.addr %s193, 18
      %s195 = smul.addr %s194, 4
      %s196 = scalar_lea.vmem %s1, %s195
      %p197 = scmp.lt.s32.totalorder %s14, 2
      %s198 = scalar_select %p197, %s14, 2
      %s199 = scalar_lea.vmem %s2, %s198
      %p200 = scmp.lt.s32.totalorder %s14, 2
      %s201 = scalar_select %p200, %s14, 2
      %s202 = smul.addr %s201, 16
      %s203 = smul.addr %s202, 8
      %s204 = scalar_lea.vmem %s3, %s203
      %v206 = vld [vmem:[%s191] sm:$0xff]
      %v207 = vld [vmem:[%s191 + $0x8] sm:$0xff]
      %v208 = vld [vmem:[%s191 + $0x10] sm:$0xff]
      %v209 = vld [vmem:[%s191 + $0x18] sm:$0xff]
      %v210 = vld [vmem:[%s191 + $0x20] sm:$0xff]
      %v211 = vld [vmem:[%s191 + $0x28] sm:$0xff]
      %v212 = vld [vmem:[%s191 + $0x30] sm:$0xff]
      %v213 = vld [vmem:[%s191 + $0x38] sm:$0xff]
      %v214 = vld [vmem:[%s191 + $0x40] sm:$0xff]
      %v215 = vld [vmem:[%s191 + $0x48] sm:$0xff]
      %v216 = vld [vmem:[%s191 + $0x50] sm:$0xff]
      %v217 = vld [vmem:[%s191 + $0x58] sm:$0xff]
      %v218 = vld [vmem:[%s191 + $0x60] sm:$0xff]
      %v219 = vld [vmem:[%s191 + $0x68] sm:$0xff]
      %v220 = vld [vmem:[%s191 + $0x70] sm:$0xff]
      %v221 = vld [vmem:[%s191 + $0x78] sm:$0xff]
      %v222 = vld [vmem:[%s196] sm:$0xf]
      %v223 = vld [vmem:[%s196 + $0x4] sm:$0xf]
      %v224 = vld [vmem:[%s196 + $0x8] sm:$0xf]
      %v225 = vld [vmem:[%s196 + $0xc] sm:$0xf]
      %v226 = vld [vmem:[%s196 + $0x10] sm:$0xf]
      %v227 = vld [vmem:[%s196 + $0x14] sm:$0xf]
      %v228 = vld [vmem:[%s196 + $0x18] sm:$0xf]
      %v229 = vld [vmem:[%s196 + $0x1c] sm:$0xf]
      %v230 = vld [vmem:[%s196 + $0x20] sm:$0xf]
      %v231 = vld [vmem:[%s196 + $0x24] sm:$0xf]
      %v232 = vld [vmem:[%s196 + $0x28] sm:$0xf]
      %v233 = vld [vmem:[%s196 + $0x2c] sm:$0xf]
      %v234 = vld [vmem:[%s196 + $0x30] sm:$0xf]
      %v235 = vld [vmem:[%s196 + $0x34] sm:$0xf]
      %v236 = vld [vmem:[%s196 + $0x38] sm:$0xf]
      %v237 = vld [vmem:[%s196 + $0x3c] sm:$0xf]
      %v238 = vld [vmem:[%s196 + $0x40] sm:$0xf]
      %v239 = vld [vmem:[%s196 + $0x44] sm:$0xf]
      %v240 = vld [vmem:[%s199] sm:$0x1]
      %v242 = vperm.slane %v240, 0
      %v260 = vunpack.c.l.b16 %v206
      %v261 = vunpack.c.h.b16 %v206
      %v262 = vunpack.c.l.b16 %v207
      %v263 = vunpack.c.h.b16 %v207
      %v264 = vunpack.c.l.b16 %v208
      %v265 = vunpack.c.h.b16 %v208
      %v266 = vunpack.c.l.b16 %v209
      %v267 = vunpack.c.h.b16 %v209
      %v268 = vunpack.c.l.b16 %v210
      %v269 = vunpack.c.h.b16 %v210
      %v270 = vunpack.c.l.b16 %v211
      %v271 = vunpack.c.h.b16 %v211
      %v272 = vunpack.c.l.b16 %v212
      %v273 = vunpack.c.h.b16 %v212
      %v274 = vunpack.c.l.b16 %v213
      %v275 = vunpack.c.h.b16 %v213
      %v276 = vunpack.c.l.b16 %v214
      %v277 = vunpack.c.h.b16 %v214
      %v278 = vunpack.c.l.b16 %v215
      %v279 = vunpack.c.h.b16 %v215
      %v280 = vunpack.c.l.b16 %v216
      %v281 = vunpack.c.h.b16 %v216
      %v282 = vunpack.c.l.b16 %v217
      %v283 = vunpack.c.h.b16 %v217
      %v284 = vunpack.c.l.b16 %v218
      %v285 = vunpack.c.h.b16 %v218
      %v286 = vunpack.c.l.b16 %v219
      %v287 = vunpack.c.h.b16 %v219
      %v288 = vunpack.c.l.b16 %v220
      %v289 = vunpack.c.h.b16 %v220
      %v290 = vunpack.c.l.b16 %v221
      %v291 = vunpack.c.h.b16 %v221
      %v292 = vpack.c.b16 %v262, %v260
      %v293 = vpack.c.b16 %v263, %v261
      %v294 = vpack.c.b16 %v266, %v264
      %v295 = vpack.c.b16 %v267, %v265
      %v296 = vpack.c.b16 %v270, %v268
      %v297 = vpack.c.b16 %v271, %v269
      %v298 = vpack.c.b16 %v274, %v272
      %v299 = vpack.c.b16 %v275, %v273
      %v300 = vpack.c.b16 %v278, %v276
      %v301 = vpack.c.b16 %v279, %v277
      %v302 = vpack.c.b16 %v282, %v280
      %v303 = vpack.c.b16 %v283, %v281
      %v304 = vpack.c.b16 %v286, %v284
      %v305 = vpack.c.b16 %v287, %v285
      %v306 = vpack.c.b16 %v290, %v288
      %v307 = vpack.c.b16 %v291, %v289
      %v334 = vunpack.c.l.b16 %v222
      %v335 = vunpack.c.l.b16 %v223
      %v336 = vunpack.c.l.b16 %v224
      %v337 = vunpack.c.l.b16 %v225
      %v338 = vunpack.c.l.b16 %v226
      %v339 = vunpack.c.l.b16 %v227
      %v340 = vunpack.c.l.b16 %v228
      %v341 = vunpack.c.l.b16 %v229
      %v342 = vunpack.c.l.b16 %v230
      %v343 = vunpack.c.l.b16 %v231
      %v344 = vunpack.c.l.b16 %v232
      %v345 = vunpack.c.l.b16 %v233
      %v346 = vunpack.c.l.b16 %v234
      %v347 = vunpack.c.l.b16 %v235
      %v348 = vunpack.c.l.b16 %v236
      %v349 = vunpack.c.l.b16 %v237
      %v350 = vunpack.c.l.b16 %v238
      %v351 = vunpack.c.l.b16 %v239
      %v352 = vpack.c.b16 %v335, %v334
      %v353 = vpack.c.b16 %v337, %v336
      %v354 = vpack.c.b16 %v339, %v338
      %v355 = vpack.c.b16 %v341, %v340
      %v356 = vpack.c.b16 %v343, %v342
      %v357 = vpack.c.b16 %v345, %v344
      %v358 = vpack.c.b16 %v347, %v346
      %v359 = vpack.c.b16 %v349, %v348
      %v360 = vpack.c.b16 %v351, %v350
      %vm370 = vcmask 130048
      %v372 = vsel %vm370, %v293, 0
      %v375 = vsel %vm370, %v295, 0
      %v378 = vsel %vm370, %v297, 0
      %v381 = vsel %vm370, %v299, 0
      %v384 = vsel %vm370, %v301, 0
      %v387 = vsel %vm370, %v303, 0
      %v390 = vsel %vm370, %v305, 0
      %v393 = vsel %vm370, %v307, 0
      %395 = vmatpush.bf16.msra.mxu0 %v359
      %396 = vmatpush.bf16.msra.mxu0 %v358
      %397 = vmatpush.bf16.msra.mxu0 %v357
      %398 = vmatpush.bf16.msra.mxu0 %v356
      %399 = vmatpush.bf16.msra.mxu0 %v355
      %400 = vmatpush.bf16.msra.mxu0 %v354
      %401 = vmatpush.bf16.msra.mxu0 %v353
      %402 = vmatpush.bf16.msra.mxu0 %v352
      %403 = vmatmul.bf16.gmra.mxu0 %v292
      %v404 = vpop.f32.mrf.mxu0
      %v405 = vadd.f32 %v242, %v404
      %v406 = vpop.f32.mrf.mxu0
      %v407 = vadd.f32 %v242, %v406
      %408 = vmatmul.bf16.gmra.mxu0 %v294
      %v409 = vpop.f32.mrf.mxu0
      %v410 = vadd.f32 %v242, %v409
      %v411 = vpop.f32.mrf.mxu0
      %v412 = vadd.f32 %v242, %v411
      %413 = vmatmul.bf16.gmra.mxu0 %v296
      %v414 = vpop.f32.mrf.mxu0
      %v415 = vadd.f32 %v242, %v414
      %v416 = vpop.f32.mrf.mxu0
      %v417 = vadd.f32 %v242, %v416
      %418 = vmatmul.bf16.gmra.mxu0 %v298
      %v419 = vpop.f32.mrf.mxu0
      %v420 = vadd.f32 %v242, %v419
      %v421 = vpop.f32.mrf.mxu0
      %v422 = vadd.f32 %v242, %v421
      %423 = vmatmul.bf16.gmra.mxu0 %v300
      %v424 = vpop.f32.mrf.mxu0
      %v425 = vadd.f32 %v242, %v424
      %v426 = vpop.f32.mrf.mxu0
      %v427 = vadd.f32 %v242, %v426
      %428 = vmatmul.bf16.gmra.mxu0 %v302
      %v429 = vpop.f32.mrf.mxu0
      %v430 = vadd.f32 %v242, %v429
      %v431 = vpop.f32.mrf.mxu0
      %v432 = vadd.f32 %v242, %v431
      %433 = vmatmul.bf16.gmra.mxu0 %v304
      %v434 = vpop.f32.mrf.mxu0
      %v435 = vadd.f32 %v242, %v434
      %v436 = vpop.f32.mrf.mxu0
      %v437 = vadd.f32 %v242, %v436
      %438 = vmatmul.bf16.gmra.mxu0 %v306
      %v439 = vpop.f32.mrf.mxu0
      %v440 = vadd.f32 %v242, %v439
      %v441 = vpop.f32.mrf.mxu0
      %v442 = vadd.f32 %v242, %v441
      %443 = vdwg.mxu0
      %444 = vmatpush.bf16.msra.mxu0 0
      %445 = vmatpush.bf16.msra.mxu0 0
      %446 = vmatpush.bf16.msra.mxu0 0
      %447 = vmatpush.bf16.msra.mxu0 0
      %448 = vmatpush.bf16.msra.mxu0 0
      %449 = vmatpush.bf16.msra.mxu0 0
      %450 = vmatpush.bf16.msra.mxu0 0
      %451 = vmatpush.bf16.msra.mxu0 %v360
      %452 = vmatmul.bf16.gmra.mxu0 %v372
      %v453 = vpop.f32.mrf.mxu0
      %v454 = vadd.f32 %v405, %v453
      %v455 = vpop.f32.mrf.mxu0
      %v456 = vadd.f32 %v407, %v455
      %457 = vmatmul.bf16.gmra.mxu0 %v375
      %v458 = vpop.f32.mrf.mxu0
      %v459 = vadd.f32 %v410, %v458
      %v460 = vpop.f32.mrf.mxu0
      %v461 = vadd.f32 %v412, %v460
      %462 = vmatmul.bf16.gmra.mxu0 %v378
      %v463 = vpop.f32.mrf.mxu0
      %v464 = vadd.f32 %v415, %v463
      %v465 = vpop.f32.mrf.mxu0
      %v466 = vadd.f32 %v417, %v465
      %467 = vmatmul.bf16.gmra.mxu0 %v381
      %v468 = vpop.f32.mrf.mxu0
      %v469 = vadd.f32 %v420, %v468
      %v470 = vpop.f32.mrf.mxu0
      %v471 = vadd.f32 %v422, %v470
      %472 = vmatmul.bf16.gmra.mxu0 %v384
      %v473 = vpop.f32.mrf.mxu0
      %v474 = vadd.f32 %v425, %v473
      %v475 = vpop.f32.mrf.mxu0
      %v476 = vadd.f32 %v427, %v475
      %477 = vmatmul.bf16.gmra.mxu0 %v387
      %v478 = vpop.f32.mrf.mxu0
      %v479 = vadd.f32 %v430, %v478
      %v480 = vpop.f32.mrf.mxu0
      %v481 = vadd.f32 %v432, %v480
      %482 = vmatmul.bf16.gmra.mxu0 %v390
      %v483 = vpop.f32.mrf.mxu0
      %v484 = vadd.f32 %v435, %v483
      %v485 = vpop.f32.mrf.mxu0
      %v486 = vadd.f32 %v437, %v485
      %487 = vmatmul.bf16.gmra.mxu0 %v393
      %v488 = vpop.f32.mrf.mxu0
      %v489 = vadd.f32 %v440, %v488
      %v490 = vpop.f32.mrf.mxu0
      %v491 = vadd.f32 %v442, %v490
      %492 = vdwg.mxu0
      %493 = vst [vmem:[%s204] sm:$0xff] %v454
      %494 = vst [vmem:[%s204 + $0x8] sm:$0xff] %v456
      %495 = vst [vmem:[%s204 + $0x10] sm:$0xff] %v459
      %496 = vst [vmem:[%s204 + $0x18] sm:$0xff] %v461
      %497 = vst [vmem:[%s204 + $0x20] sm:$0xff] %v464
      %498 = vst [vmem:[%s204 + $0x28] sm:$0xff] %v466
      %499 = vst [vmem:[%s204 + $0x30] sm:$0xff] %v469
      %500 = vst [vmem:[%s204 + $0x38] sm:$0xff] %v471
      %501 = vst [vmem:[%s204 + $0x40] sm:$0xff] %v474
      %502 = vst [vmem:[%s204 + $0x48] sm:$0xff] %v476
      %503 = vst [vmem:[%s204 + $0x50] sm:$0xff] %v479
      %504 = vst [vmem:[%s204 + $0x58] sm:$0xff] %v481
      %505 = vst [vmem:[%s204 + $0x60] sm:$0xff] %v484
      %506 = vst [vmem:[%s204 + $0x68] sm:$0xff] %v486
      %507 = vst [vmem:[%s204 + $0x70] sm:$0xff] %v489
      %508 = vst [vmem:[%s204 + $0x78] sm:$0xff] %v491
      %p509 = scmp.lt.s32.totalorder %s14, 2
      %s510 = scalar_select %p509, %s14, 2
      %s511 = smul.addr %s510, 16
      %s512 = smul.addr %s511, 8
      %s513 = scalar_lea.vmem %s3, %s512
      // Predicated region
      $region33: #{backbone_with_fpn_forward.13} parent=31 // pred_check
        %p514 = pneg %p110
      $region34: #{backbone_with_fpn_forward.13} parent=31 // pred_check_branch
        %516 = sbr.rel (%p514) target = $region36
      $region35: #{backbone_with_fpn_forward.13} parent=31 // pred_region
        _
      $region36: #{backbone_with_fpn_forward.13} parent=31 // pred_fallthru
        _
    $region32: #{backbone_with_fpn_forward.13} parent=5 // pred_fallthru
      _
    %p517 = scmp.le.s32.totalorder 2, %s9
    // Predicated region
    $region37: #{backbone_with_fpn_forward.13} parent=5 // pred_check
      %p518 = pneg %p517
    $region38: #{backbone_with_fpn_forward.13} parent=5 // pred_check_branch
      %520 = sbr.rel (%p518) target = $region40
    $region39: #{backbone_with_fpn_forward.13} parent=5 // pred_region
      %s521 = ssub.s32 %s9, 2
      // Predicated region
      $region41: #{backbone_with_fpn_forward.13} parent=39 // pred_check
        %p522 = pneg %p116
      $region42: #{backbone_with_fpn_forward.13} parent=39 // pred_check_branch
        %524 = sbr.rel (%p522) target = $region44
      $region43: #{backbone_with_fpn_forward.13} parent=39 // pred_region
        %p525 = scmp.lt.s32.totalorder %s15, 2
        %s526 = scalar_select %p525, %s15, 2
        %s527 = smul.addr %s526, 16
        %s528 = smul.addr %s527, 8
        %s529 = scalar_lea.vmem %s3, %s528
      $region44: #{backbone_with_fpn_forward.13} parent=39 // pred_fallthru
        _
    $region40: #{backbone_with_fpn_forward.13} parent=5 // pred_fallthru
      _
  $region6: #{backbone_with_fpn_forward.13} parent=0 // loop_footer
    %s13 = sadd.s32 1, %s9
  $region7: #{backbone_with_fpn_forward.13} parent=0 // loop_footer_branch
    %8 = sbr.rel target = $region3
  $region8: #{backbone_with_fpn_forward.13} parent=0 // loop_exit
    _

</llo_original>
